<compile_context>
chip_gen: v7x
topology: tpu7x:2x2x1
jax: 0.10.0
libtpu: 0.0.40
codegen_flags: <defaults>
</compile_context>

<pallas_src>
import functools

import jax
import jax.numpy as jnp
from jax import lax
from jax.experimental import pallas as pl
from jax.experimental.pallas import tpu as pltpu


def _round_up(x, m):
    return ((x + m - 1) // m) * m


# ----------------------------------------------------------------------------- #
# Pallas kernel: mini-PointNet over a tile of groups
#   x_ref : (S, TG, 8)  coordinates, point axis leading, channels (padded to 8)
#                       on the lane axis
#   out   : (TG, D_pad) one lane-dense (padded) token per group
# The TG dimension is processed in `n_chunks` independent sub-chunks so the MXU
# work of one chunk overlaps the VPU epilogue of the previous one.
# ----------------------------------------------------------------------------- #
def _pointnet_kernel(x_ref, w1_ref, t1_ref, w2_ref, b2_ref,
                     w3g_ref, w3l_ref, t3_ref, w4_ref, b4_ref, out_ref,
                     *, s, cg, n_chunks):
    c2 = w2_ref.shape[1]          # 256
    c3 = w3l_ref.shape[1]         # 512
    dp = w4_ref.shape[1]          # padded token dim (multiple of 128)
    cr = cg * s                   # rows per chunk (point-major: row = p*cg + g)
    ep = t1_ref.dtype             # epilogue dtype: f32 (v5e) or bf16 (v6e/v7x)

    def chunk(ci, carry):
        g0 = pl.multiple_of(ci * cg, cg)

        # Point-major rows keep both per-group max-pools as leading-axis maxima.
        xb = x_ref[:, pl.ds(g0, cg), :].reshape(cr, 8).astype(jnp.bfloat16)

        # first_conv[0:3]: Conv1d(3,128,1) on the MXU (BN scale folded into w1),
        # then shift + ReLU on the VPU.
        a1 = jnp.dot(xb, w1_ref[...], preferred_element_type=jnp.float32)
        h1 = jnp.maximum(a1.astype(ep) + t1_ref[...], 0).astype(jnp.bfloat16)

        # first_conv[3]: Conv1d(128,256,1) (bias, no activation).  K=128 only
        # drives half of a 256x256 MXU, but it is <10% of the FLOPs.
        a2 = jnp.dot(h1, w2_ref[...], preferred_element_type=jnp.float32)
        fb = (a2.astype(ep) + b2_ref[...]).astype(jnp.bfloat16)          # (cr, 256)

        # Per-group global max-pool over the point (leading) axis -> pure VPU.
        g = jnp.max(fb.reshape(s, cg, c2), axis=0)                       # (cg, 256)

        # second_conv[0:3]: Conv1d(512,512,1) over concat([global, local]),
        # split into two matmuls so the global half only does cg rows.
        # BN scale s3 is folded into both weight halves.
        h2l = jnp.dot(fb, w3l_ref[...], preferred_element_type=jnp.float32)
        h2g = jnp.dot(g, w3g_ref[...], preferred_element_type=jnp.float32)
        h2 = h2l.astype(ep).reshape(s, cg, c3) + h2g.astype(ep)[None, :, :]
        h2 = jnp.maximum(h2 + t3_ref[...], 0).astype(jnp.bfloat16).reshape(cr, c3)

        # second_conv[3]: Conv1d(512, D_pad, 1) + final per-group max-pool ->
        # lane-dense token store.
        o = jnp.dot(h2, w4_ref[...], preferred_element_type=jnp.float32) + b4_ref[...]
        out_ref[pl.ds(g0, cg), :] = (
            jnp.max(o.reshape(s, cg, dp), axis=0).astype(out_ref.dtype))
        return carry

    if n_chunks == 1:
        chunk(0, 0)
    else:
        # Unrolled so the LLO scheduler interleaves chunk k's MXU pushes with
        # chunk k-1's epilogue; also halves peak live intermediates.
        lax.fori_loop(0, n_chunks, chunk, 0, unroll=True)


def _chip_config():
    kind = ""
    try:
        kind = jax.devices()[0].device_kind.lower()
    except Exception:
        pass
    if "v7" in kind:
        # 64 MiB VMEM/TC: keep the scoped limit <= 48 MiB, tg <= 128, bf16 epilogues.
        return dict(tile_groups=128, vmem_limit=48 * 1024 * 1024, ep_dtype=jnp.bfloat16)
    if "v6" in kind:
        # 128 MiB VMEM: bigger tiles amortize the ~0.35us/step pipeline overhead.
        return dict(tile_groups=256, vmem_limit=64 * 1024 * 1024, ep_dtype=jnp.bfloat16)
    # v5e / unknown: no bf16 VPU -> keep epilogues in f32, conservative VMEM.
    return dict(tile_groups=128, vmem_limit=32 * 1024 * 1024, ep_dtype=jnp.float32)


def pointnet_encode(groups_flat, params, *, tile_groups=None):
    """groups_flat: (B*G, S, 3) float32 -> tokens (B*G, token_dim) float32."""
    bg, s, c = groups_flat.shape
    assert c == 3, "PointNetEncoder here expects 3 input channels"
    cfg = _chip_config()
    if tile_groups is None:
        tile_groups = cfg["tile_groups"]
    ep_dtype = cfg["ep_dtype"]

    token_dim = params["w4"].shape[1]
    c2 = params["w2"].shape[1]                 # 256: size of the "global" half of w3
    d_pad = _round_up(token_dim, 128)          # lane-dense output channels

    # Tile sizing: large tiles feed the MXU; always aim for >= 2 grid steps so the
    # "parallel" axis can shard across both TensorCores on v7x.
    if bg >= 2 * tile_groups:
        tg = tile_groups
    else:
        tg = min(_round_up(max(-(-bg // 2), 8), 8), tile_groups)
    bg_pad = _round_up(bg, tg)
    n_chunks = 2 if tg % 16 == 0 else 1        # in-kernel TG chunking (needs cg % 8 == 0)
    cg = tg // n_chunks

    # Coordinates: channels zero-padded 3 -> 8 (lane dim = full array dim), point
    # axis leading so per-group pools are leading-axis maxima inside the kernel.
    x = groups_flat.astype(jnp.float32)
    x = jnp.pad(x, ((0, bg_pad - bg), (0, 0), (0, 8 - c)))
    x = jnp.transpose(x, (1, 0, 2))            # (S, BG_pad, 8)

    # Fold BN scales into the conv weights: (x@W)*scale + shift == x@(W*scale) + shift.
    w1 = params["w1"].astype(jnp.float32) * params["s1"].reshape(1, -1)
    w1 = jnp.pad(w1, ((0, 8 - c), (0, 0)))                      # (8, 128)
    w3 = params["w3"].astype(jnp.float32) * params["s3"].reshape(1, -1)
    w4 = params["w4"].astype(jnp.float32)
    b4 = params["b4"].reshape(1, -1).astype(jnp.float32)
    if d_pad != token_dim:                     # pad only to the next 128 multiple
        w4 = jnp.pad(w4, ((0, 0), (0, d_pad - token_dim)))
        b4 = jnp.pad(b4, ((0, 0), (0, d_pad - token_dim)))

    weights = [
        w1.astype(jnp.bfloat16),                                # (8, 128)    MXU
        params["t1"].reshape(1, -1).astype(ep_dtype),           # (1, 128)    shift
        params["w2"].astype(jnp.bfloat16),                      # (128, 256)  MXU
        params["b2"].reshape(1, -1).astype(ep_dtype),           # (1, 256)    bias
        w3[:c2].astype(jnp.bfloat16),                           # global half (256, 512)
        w3[c2:].astype(jnp.bfloat16),                           # local half  (256, 512)
        params["t3"].reshape(1, -1).astype(ep_dtype),           # (1, 512)    shift
        w4.astype(jnp.bfloat16),                                # (512, d_pad) MXU
        b4,                                                     # (1, d_pad)  f32
    ]

    in_specs = [pl.BlockSpec((s, tg, 8), lambda i: (0, i, 0))]
    # Constant-index-map weight blocks are fetched once and reused across steps.
    # TODO(synk): pipeline_mode=pl.Buffered(1) on these would shave ~1 MiB of
    # duplicated weight buffers (only matters against v7x's 64 MiB VMEM).
    for w in weights:
        in_specs.append(pl.BlockSpec(w.shape, lambda i, n=w.ndim: (0,) * n))

    kernel = functools.partial(_pointnet_kernel, s=s, cg=cg, n_chunks=n_chunks)

    out = pl.pallas_call(
        kernel,
        out_shape=jax.ShapeDtypeStruct((bg_pad, d_pad), jnp.float32),
        grid_spec=pltpu.PrefetchScalarGridSpec(
            num_scalar_prefetch=0,
            grid=(bg_pad // tg,),
            in_specs=in_specs,
            out_specs=pl.BlockSpec((tg, d_pad), lambda i: (i, 0)),
        ),
        compiler_params=pltpu.CompilerParams(
            dimension_semantics=("parallel",),
            vmem_limit_bytes=cfg["vmem_limit"],
        ),
    )(x, *weights)

    return out[:bg, :token_dim]


# ----------------------------------------------------------------------------- #
# Parameter init (deterministic, synthetic)
# ----------------------------------------------------------------------------- #
def init_params(key, token_dim):
    h1, h2, hcat, h3 = 128, 256, 512, 512
    ks = jax.random.split(key, 8)

    def dense(k, fan_in, fan_out):
        return jax.random.normal(k, (fan_in, fan_out), jnp.float32) / jnp.sqrt(fan_in)

    w1 = dense(ks[0], 3, h1);    b1 = 0.02 * jax.random.normal(ks[1], (h1,), jnp.float32)
    w2 = dense(ks[2], h1, h2);   b2 = 0.02 * jax.random.normal(ks[3], (h2,), jnp.float32)
    w3 = dense(ks[4], hcat, h3); b3 = 0.02 * jax.random.normal(ks[5], (h3,), jnp.float32)
    w4 = dense(ks[6], h3, token_dim)
    b4 = 0.02 * jax.random.normal(ks[7], (token_dim,), jnp.float32)

    # Eval-mode BatchNorm1d with default params/stats, folded with the conv bias:
    #   y = ((x@W + b) - mean)/sqrt(var+eps)*gamma + beta = (x@W)*scale + shift
    eps = 1e-5
    scale1 = jnp.ones((h1,), jnp.float32) / jnp.sqrt(1.0 + eps)
    shift1 = b1 * scale1
    scale3 = jnp.ones((h3,), jnp.float32) / jnp.sqrt(1.0 + eps)
    shift3 = b3 * scale3

    return {
        "w1": w1, "s1": scale1.reshape(1, -1), "t1": shift1.reshape(1, -1),
        "w2": w2, "b2": b2.reshape(1, -1),
        "w3": w3, "s3": scale3.reshape(1, -1), "t3": shift3.reshape(1, -1),
        "w4": w4, "b4": b4.reshape(1, -1),
    }


# ----------------------------------------------------------------------------- #
# Grouping glue (plain JAX; sequential / data-dependent ops)
# ----------------------------------------------------------------------------- #
def farthest_point_sample(xyz, num_groups, start_idx):
    """xyz: (B,N,3), start_idx: (B,) int32 -> centers (B,G,3), indices (B,G)."""
    B, N, _ = xyz.shape
    sel = jnp.zeros((B, num_groups), jnp.int32).at[:, 0].set(start_idx)
    dmin = jnp.full((B, N), jnp.inf, jnp.float32)

    def body(i, carry):
        sel, dmin = carry
        last = sel[:, i - 1]                                            # (B,)
        lastpt = jnp.take_along_axis(xyz, last[:, None, None], axis=1)  # (B,1,3)
        d = jnp.sum((xyz - lastpt) ** 2, axis=-1)                       # (B,N)
        dmin = jnp.minimum(dmin, d)
        nxt = jnp.argmax(dmin, axis=-1).astype(jnp.int32)
        sel = sel.at[:, i].set(nxt)
        return sel, dmin

    sel, _ = lax.fori_loop(1, num_groups, body, (sel, dmin))
    centers = jnp.take_along_axis(xyz, sel[..., None], axis=1)          # (B,G,3)
    return centers, sel


def knn_group(points, centers, group_size):
    """points: (B,N,C), centers: (B,G,3) -> groups (B,G,K,C)."""
    d = jnp.sum((centers[:, :, None, :] - points[:, None, :, :3]) ** 2, axis=-1)  # (B,G,N)
    _, idx = lax.top_k(-d, group_size)                                  # (B,G,K)
    groups = jax.vmap(lambda p, i: p[i])(points, idx)                   # (B,G,K,C)
    return groups


def pointcloud_tokenizer(points, params, *, num_groups, group_size, group_radius, key):
    """points: (B,N,3) -> (tokens (B,G,token_dim), centers (B,G,3))."""
    B, N, C = points.shape
    start = jax.random.randint(key, (B,), 0, N, dtype=jnp.int32)        # random_start_point=True
    centers, _ = farthest_point_sample(points[..., :3].astype(jnp.float32), num_groups, start)

    if group_radius is None:
        groups = knn_group(points, centers, group_size)                 # (B,G,K,C)
    else:
        # TODO(synk): pytorch3d ball_query + masked_gather (group_radius != None)
        # branch not reproduced; demo exercises the group_radius=None (kNN) branch.
        raise NotImplementedError("group_radius path not implemented")

    groups = groups.at[..., :3].add(-centers[:, :, None, :])            # center each group
    if group_radius is not None:
        groups = groups / group_radius

    tokens = pointnet_encode(
        groups.reshape(B * num_groups, group_size, C).astype(jnp.float32), params
    )
    return tokens.reshape(B, num_groups, -1), centers


# ----------------------------------------------------------------------------- #
if __name__ == "__main__":
    B, N = 2, 64
    num_groups, group_size, token_dim = 8, 16, 32
    group_radius = None

    root = jax.random.PRNGKey(0)
    k_pts, k_params, k_fps = jax.random.split(root, 3)

    points = jax.random.normal(k_pts, (B, N, 3), jnp.float32)
    params = init_params(k_params, token_dim)

    tokens, centers = pointcloud_tokenizer(
        points, params,
        num_groups=num_groups, group_size=group_size,
        group_radius=group_radius, key=k_fps,
    )
    tokens = jax.block_until_ready(tokens)
    centers = jax.block_until_ready(centers)

    assert tokens.shape == (B, num_groups, token_dim)
    assert centers.shape == (B, num_groups, 3)
    assert bool(jnp.all(jnp.isfinite(tokens)))
    print("KERNEL_OK")
</pallas_src>

<mosaic_0001>
module attributes {stable_mosaic.version = 11 : i64} {
  func.func @_pointnet_kernel(%arg0: i32, %arg1: memref<16x8x8xf32, #tpu.memory_space<vmem>>, %arg2: memref<8x128xbf16, #tpu.memory_space<vmem>>, %arg3: memref<1x128xf32, #tpu.memory_space<vmem>>, %arg4: memref<128x256xbf16, #tpu.memory_space<vmem>>, %arg5: memref<1x256xf32, #tpu.memory_space<vmem>>, %arg6: memref<256x512xbf16, #tpu.memory_space<vmem>>, %arg7: memref<256x512xbf16, #tpu.memory_space<vmem>>, %arg8: memref<1x512xf32, #tpu.memory_space<vmem>>, %arg9: memref<512x128xbf16, #tpu.memory_space<vmem>>, %arg10: memref<1x128xf32, #tpu.memory_space<vmem>>, %arg11: memref<8x128xf32, #tpu.memory_space<vmem>>) attributes {dimension_semantics = [#tpu.dimension_semantics<parallel>], iteration_bounds = array<i64: 2>, scalar_prefetch = 0 : i64, scratch_operands = 0 : i64, tpu.core_type = #tpu.core_type<tc>, window_params = [{transform_indices = @transform_0, window_bounds = array<i64: 16, 8, 8>}, {pipeline_mode = #tpu.pipeline_mode<synchronous>, transform_indices = @transform_1, window_bounds = array<i64: 8, 128>}, {pipeline_mode = #tpu.pipeline_mode<synchronous>, transform_indices = @transform_2, window_bounds = array<i64: 1, 128>}, {pipeline_mode = #tpu.pipeline_mode<synchronous>, transform_indices = @transform_3, window_bounds = array<i64: 128, 256>}, {pipeline_mode = #tpu.pipeline_mode<synchronous>, transform_indices = @transform_4, window_bounds = array<i64: 1, 256>}, {pipeline_mode = #tpu.pipeline_mode<synchronous>, transform_indices = @transform_5, window_bounds = array<i64: 256, 512>}, {pipeline_mode = #tpu.pipeline_mode<synchronous>, transform_indices = @transform_6, window_bounds = array<i64: 256, 512>}, {pipeline_mode = #tpu.pipeline_mode<synchronous>, transform_indices = @transform_7, window_bounds = array<i64: 1, 512>}, {pipeline_mode = #tpu.pipeline_mode<synchronous>, transform_indices = @transform_8, window_bounds = array<i64: 512, 128>}, {pipeline_mode = #tpu.pipeline_mode<synchronous>, transform_indices = @transform_9, window_bounds = array<i64: 1, 128>}, {transform_indices = @transform_10, window_bounds = array<i64: 8, 128>}]} {
    %c0_i32 = arith.constant 0 : i32
    %0 = tpu.assume_multiple %c0_i32, 8 : i32
    %c0 = arith.constant 0 : index
    %1 = arith.index_cast %0 : i32 to index
    %c0_0 = arith.constant 0 : index
    %2 = vector.load %arg1[%c0, %1, %c0_0] : memref<16x8x8xf32, #tpu.memory_space<vmem>>, vector<16x8x8xf32>
    %3 = vector.shape_cast %2 : vector<16x8x8xf32> to vector<128x8xf32>
    %4 = arith.truncf %3 : vector<128x8xf32> to vector<128x8xbf16>
    %c0_1 = arith.constant 0 : index
    %c0_2 = arith.constant 0 : index
    %5 = vector.load %arg2[%c0_1, %c0_2] : memref<8x128xbf16, #tpu.memory_space<vmem>>, vector<8x128xbf16>
    %cst = arith.constant dense<0.000000e+00> : vector<128x128xf32>
    %6 = tpu.matmul %4, %5, %cst {dimension_numbers = #tpu.dot_dimension_numbers<[1], [0], [0], [1], [0, 0, 1, 1], [], []>} : vector<128x8xbf16>, vector<8x128xbf16>, vector<128x128xf32> -> vector<128x128xf32>
    %c0_3 = arith.constant 0 : index
    %c0_4 = arith.constant 0 : index
    %7 = vector.load %arg3[%c0_3, %c0_4] : memref<1x128xf32, #tpu.memory_space<vmem>>, vector<1x128xf32>
    %8 = vector.broadcast %7 : vector<1x128xf32> to vector<128x128xf32>
    %9 = arith.addf %6, %8 : vector<128x128xf32>
    %cst_5 = arith.constant 0.000000e+00 : f32
    %10 = vector.broadcast %cst_5 : f32 to vector<128x128xf32>
    %11 = arith.maximumf %9, %10 : vector<128x128xf32>
    %12 = arith.truncf %11 : vector<128x128xf32> to vector<128x128xbf16>
    %c0_6 = arith.constant 0 : index
    %c0_7 = arith.constant 0 : index
    %13 = vector.load %arg4[%c0_6, %c0_7] : memref<128x256xbf16, #tpu.memory_space<vmem>>, vector<128x256xbf16>
    %cst_8 = arith.constant dense<0.000000e+00> : vector<128x256xf32>
    %14 = tpu.matmul %12, %13, %cst_8 {dimension_numbers = #tpu.dot_dimension_numbers<[1], [0], [0], [1], [0, 0, 1, 1], [], []>} : vector<128x128xbf16>, vector<128x256xbf16>, vector<128x256xf32> -> vector<128x256xf32>
    %c0_9 = arith.constant 0 : index
    %c0_10 = arith.constant 0 : index
    %15 = vector.load %arg5[%c0_9, %c0_10] : memref<1x256xf32, #tpu.memory_space<vmem>>, vector<1x256xf32>
    %16 = vector.broadcast %15 : vector<1x256xf32> to vector<128x256xf32>
    %17 = arith.addf %14, %16 : vector<128x256xf32>
    %18 = arith.truncf %17 : vector<128x256xf32> to vector<128x256xbf16>
    %19 = vector.shape_cast %18 : vector<128x256xbf16> to vector<16x8x256xbf16>
    %cst_11 = arith.constant dense<0xFF80> : vector<8x256xbf16>
    %20 = vector.multi_reduction <maximumf>, %19, %cst_11 [0] : vector<16x8x256xbf16> to vector<8x256xbf16>
    %c0_12 = arith.constant 0 : index
    %c0_13 = arith.constant 0 : index
    %21 = vector.load %arg7[%c0_12, %c0_13] : memref<256x512xbf16, #tpu.memory_space<vmem>>, vector<256x512xbf16>
    %cst_14 = arith.constant dense<0.000000e+00> : vector<128x512xf32>
    %22 = tpu.matmul %18, %21, %cst_14 {dimension_numbers = #tpu.dot_dimension_numbers<[1], [0], [0], [1], [0, 0, 1, 1], [], []>} : vector<128x256xbf16>, vector<256x512xbf16>, vector<128x512xf32> -> vector<128x512xf32>
    %c0_15 = arith.constant 0 : index
    %c0_16 = arith.constant 0 : index
    %23 = vector.load %arg6[%c0_15, %c0_16] : memref<256x512xbf16, #tpu.memory_space<vmem>>, vector<256x512xbf16>
    %cst_17 = arith.constant dense<0.000000e+00> : vector<8x512xf32>
    %24 = tpu.matmul %20, %23, %cst_17 {dimension_numbers = #tpu.dot_dimension_numbers<[1], [0], [0], [1], [0, 0, 1, 1], [], []>} : vector<8x256xbf16>, vector<256x512xbf16>, vector<8x512xf32> -> vector<8x512xf32>
    %25 = vector.shape_cast %22 : vector<128x512xf32> to vector<16x8x512xf32>
    %26 = vector.shape_cast %24 : vector<8x512xf32> to vector<1x8x512xf32>
    %27 = vector.broadcast %26 : vector<1x8x512xf32> to vector<16x8x512xf32>
    %28 = arith.addf %25, %27 : vector<16x8x512xf32>
    %c0_18 = arith.constant 0 : index
    %c0_19 = arith.constant 0 : index
    %29 = vector.load %arg8[%c0_18, %c0_19] : memref<1x512xf32, #tpu.memory_space<vmem>>, vector<1x512xf32>
    %30 = vector.shape_cast %29 : vector<1x512xf32> to vector<1x1x512xf32>
    %31 = vector.broadcast %30 : vector<1x1x512xf32> to vector<16x8x512xf32>
    %32 = arith.addf %28, %31 : vector<16x8x512xf32>
    %cst_20 = arith.constant 0.000000e+00 : f32
    %33 = vector.broadcast %cst_20 : f32 to vector<16x8x512xf32>
    %34 = arith.maximumf %32, %33 : vector<16x8x512xf32>
    %35 = arith.truncf %34 : vector<16x8x512xf32> to vector<16x8x512xbf16>
    %36 = vector.shape_cast %35 : vector<16x8x512xbf16> to vector<128x512xbf16>
    %c0_21 = arith.constant 0 : index
    %c0_22 = arith.constant 0 : index
    %37 = vector.load %arg9[%c0_21, %c0_22] : memref<512x128xbf16, #tpu.memory_space<vmem>>, vector<512x128xbf16>
    %cst_23 = arith.constant dense<0.000000e+00> : vector<128x128xf32>
    %38 = tpu.matmul %36, %37, %cst_23 {dimension_numbers = #tpu.dot_dimension_numbers<[1], [0], [0], [1], [0, 0, 1, 1], [], []>} : vector<128x512xbf16>, vector<512x128xbf16>, vector<128x128xf32> -> vector<128x128xf32>
    %c0_24 = arith.constant 0 : index
    %c0_25 = arith.constant 0 : index
    %39 = vector.load %arg10[%c0_24, %c0_25] : memref<1x128xf32, #tpu.memory_space<vmem>>, vector<1x128xf32>
    %40 = vector.broadcast %39 : vector<1x128xf32> to vector<128x128xf32>
    %41 = arith.addf %38, %40 : vector<128x128xf32>
    %42 = vector.shape_cast %41 : vector<128x128xf32> to vector<16x8x128xf32>
    %cst_26 = arith.constant dense<0xFF800000> : vector<8x128xf32>
    %43 = vector.multi_reduction <maximumf>, %42, %cst_26 [0] : vector<16x8x128xf32> to vector<8x128xf32>
    %44 = arith.index_cast %0 : i32 to index
    %c0_27 = arith.constant 0 : index
    %45 = vector.load %arg11[%44, %c0_27] : memref<8x128xf32, #tpu.memory_space<vmem>>, vector<8x128xf32>
    tpu.vector_store %arg11[%44, %c0_27], %43 {strides = array<i32>} : memref<8x128xf32, #tpu.memory_space<vmem>>, vector<8x128xf32>,
    return
  }
  func.func @transform_0(%arg0: i32) -> (i32, i32, i32) {
    %c0_i32 = arith.constant 0 : i32
    %c0_i32_0 = arith.constant 0 : i32
    %c0_i32_1 = arith.constant 0 : i32
    return %c0_i32, %arg0, %c0_i32_0 : i32, i32, i32
  }
  func.func @transform_1(%arg0: i32) -> (i32, i32) {
    %c0_i32 = arith.constant 0 : i32
    %c0_i32_0 = arith.constant 0 : i32
    %c0_i32_1 = arith.constant 0 : i32
    return %c0_i32, %c0_i32_0 : i32, i32
  }
  func.func @transform_2(%arg0: i32) -> (i32, i32) {
    %c0_i32 = arith.constant 0 : i32
    %c0_i32_0 = arith.constant 0 : i32
    %c0_i32_1 = arith.constant 0 : i32
    return %c0_i32, %c0_i32_0 : i32, i32
  }
  func.func @transform_3(%arg0: i32) -> (i32, i32) {
    %c0_i32 = arith.constant 0 : i32
    %c0_i32_0 = arith.constant 0 : i32
    %c0_i32_1 = arith.constant 0 : i32
    return %c0_i32, %c0_i32_0 : i32, i32
  }
  func.func @transform_4(%arg0: i32) -> (i32, i32) {
    %c0_i32 = arith.constant 0 : i32
    %c0_i32_0 = arith.constant 0 : i32
    %c0_i32_1 = arith.constant 0 : i32
    return %c0_i32, %c0_i32_0 : i32, i32
  }
  func.func @transform_5(%arg0: i32) -> (i32, i32) {
    %c0_i32 = arith.constant 0 : i32
    %c0_i32_0 = arith.constant 0 : i32
    %c0_i32_1 = arith.constant 0 : i32
    return %c0_i32, %c0_i32_0 : i32, i32
  }
  func.func @transform_6(%arg0: i32) -> (i32, i32) {
    %c0_i32 = arith.constant 0 : i32
    %c0_i32_0 = arith.constant 0 : i32
    %c0_i32_1 = arith.constant 0 : i32
    return %c0_i32, %c0_i32_0 : i32, i32
  }
  func.func @transform_7(%arg0: i32) -> (i32, i32) {
    %c0_i32 = arith.constant 0 : i32
    %c0_i32_0 = arith.constant 0 : i32
    %c0_i32_1 = arith.constant 0 : i32
    return %c0_i32, %c0_i32_0 : i32, i32
  }
  func.func @transform_8(%arg0: i32) -> (i32, i32) {
    %c0_i32 = arith.constant 0 : i32
    %c0_i32_0 = arith.constant 0 : i32
    %c0_i32_1 = arith.constant 0 : i32
    return %c0_i32, %c0_i32_0 : i32, i32
  }
  func.func @transform_9(%arg0: i32) -> (i32, i32) {
    %c0_i32 = arith.constant 0 : i32
    %c0_i32_0 = arith.constant 0 : i32
    %c0_i32_1 = arith.constant 0 : i32
    return %c0_i32, %c0_i32_0 : i32, i32
  }
  func.func @transform_10(%arg0: i32) -> (i32, i32) {
    %c0_i32 = arith.constant 0 : i32
    %c0_i32_0 = arith.constant 0 : i32
    return %arg0, %c0_i32 : i32, i32
  }
}

</mosaic_0001>

<llo_original>
// kernel: tpu_custom_call.1
$region0: #{tpu_custom_call.1}
  #allocation0 [shape = 'u32[]', space=smem, size = 0x4, offset = 0x4, fixed_abs, tag = 'smem constant byte address 0x4 - core index']
  #allocation1 [shape = 'u32[144,128]{1,0:T(1,128)}', space=vmem, size = 0x12000, scoped, tag = 'internal scratch']
  %s0 = inlined_call_operand.vmem [shape: f32[16,16,8], index: 0, kind: input, shape index: {}]
  %s1 = inlined_call_operand.vmem [shape: bf16[8,128], index: 1, kind: input, shape index: {}]
  %s2 = inlined_call_operand.vmem [shape: f32[1,128], index: 2, kind: input, shape index: {}]
  %s3 = inlined_call_operand.vmem [shape: bf16[128,256], index: 3, kind: input, shape index: {}]
  %s4 = inlined_call_operand.vmem [shape: f32[1,256], index: 4, kind: input, shape index: {}]
  %s5 = inlined_call_operand.hbm [shape: bf16[256,512], index: 5, kind: input, shape index: {}]
  %s6 = inlined_call_operand.hbm [shape: bf16[256,512], index: 6, kind: input, shape index: {}]
  %s7 = inlined_call_operand.vmem [shape: f32[1,512], index: 7, kind: input, shape index: {}]
  %s8 = inlined_call_operand.vmem [shape: bf16[512,128], index: 8, kind: input, shape index: {}]
  %s9 = inlined_call_operand.vmem [shape: f32[1,128], index: 9, kind: input, shape index: {}]
  %s10 = inlined_call_operand.hbm [shape: f32[16,128], index: 10, kind: output, shape index: {}]
  %s11 = sld [smem:[#allocation0]]
  $region119: #{tpu_custom_call.1} parent=0
    _
  %s13 = ssub.s32 1, %s11
  %s14 = scalar_select 0, %s13, %s11
  $region1: #{tpu_custom_call.1} parent=0
    #allocation2 [shape = 'u8[131072]{0}', space=vmem, size = 0x20000, scoped, tag = 'input window, operand 0']
    #allocation3 [shape = 'u8[262144]{0}', space=vmem, size = 0x40000, scoped, tag = 'input window, operand 5, single buffered']
    #allocation4 [shape = 's32[2]{0}', space=sflag, size = 0x8, scoped, tag = 'scoped memory for tpu_custom_call.1']
    #allocation5 [shape = 's32[2]{0}', space=sflag, size = 0x8, scoped, tag = 'scoped memory for tpu_custom_call.1']
    #allocation6 [shape = 'u8[262144]{0}', space=vmem, size = 0x40000, scoped, tag = 'input window, operand 6, single buffered']
    #allocation7 [shape = 's32[1]{0}', space=sflag, size = 0x4, scoped, tag = 'scoped memory for tpu_custom_call.1']
    #allocation8 [shape = 'u8[8192]{0}', space=vmem, size = 0x2000, scoped, tag = 'output window, operand 0']
    %15 = vsyncpa [#allocation4], 0
    %16 = vsyncpa [#allocation7], 0
    %17 = vsyncpa [#allocation5], 0
    %s18 = scalar_lea.sflag [#allocation5], 1
    %19 = vsyncpa %s18, 0
    loop: start=0, step=1, limit=4
    $region2: #{tpu_custom_call.1} parent=1 // loop_pre_header
      _
    $region3: #{tpu_custom_call.1} parent=1 // loop_header
      %s21 = sphi 0, %s25
      %p22 = scmp.ge.s32.totalorder %s21, 4
      %s31 = sphi 0, %s33
      %s34 = sphi 0, %s31
      %s35 = sphi 0, %s34
      %s51 = sphi 0, %s35
      %s55 = sphi 0, %s55
      %s57 = sphi 0, %s55
      %s58 = sphi 0, %s57
      %s72 = sphi 0, %s58
      %s76 = sphi 0, %s76
      %s78 = sphi 0, %s76
      %s79 = sphi 0, %s78
      %s93 = sphi 0, %s79
      %s97 = sphi 0, %s97
      %s99 = sphi 0, %s97
      %s100 = sphi 0, %s99
      %s114 = sphi 0, %s100
      %s118 = sphi 0, %s118
      %s120 = sphi 0, %s118
      %s121 = sphi 0, %s120
      %s135 = sphi 0, %s121
      %s139 = sphi 0, %s139
      %s141 = sphi 0, %s139
      %s142 = sphi 0, %s141
      %s156 = sphi 0, %s142
      %s160 = sphi 0, %s160
      %s162 = sphi 0, %s160
      %s163 = sphi 0, %s162
      %s177 = sphi 0, %s163
      %s181 = sphi 0, %s181
      %s183 = sphi 0, %s181
      %s184 = sphi 0, %s183
      %s198 = sphi 0, %s184
      %s202 = sphi 0, %s202
      %s204 = sphi 0, %s202
      %s205 = sphi 0, %s204
      %s219 = sphi 0, %s205
      %s223 = sphi 0, %s223
      %s225 = sphi 0, %s223
      %s226 = sphi 0, %s225
      %s240 = sphi 0, %s226
      %s246 = sphi 0, %s248
      %s249 = sphi 0, %s246
      %s250 = sphi 0, %s249
      %s266 = sphi 0, %s250
    $region4: #{tpu_custom_call.1} parent=1 // loop_header_branch
      %24 = sbr.rel (%p22) target = $region8
    $region5: #{tpu_custom_call.1} parent=1 // loop_body
      %s26 = ssub.s32 %s21, 1
      %s27 = ssub.s32 %s21, 2
      %s28 = sadd.s32 %s21, 1
      %s29 = ssub.s32 %s21, %s28
      %p30 = scmp.eq.s32.totalorder %s29, 0
      %s32 = sadd.s32 %s31, 1
      %s33 = scalar_select %p30, %s31, %s32
      %p36 = pneg %p30
      %p37 = scmp.eq.s32.totalorder %s21, 1
      %p38 = por %p36, %p37
      %p39 = scmp.ne.s32.totalorder %s31, %s34
      %p40 = scmp.eq.s32.totalorder %s21, 0
      %p41 = por %p39, %p40
      %p42 = scmp.ne.s32.totalorder %s31, %s34
      %p43 = scmp.eq.s32.totalorder %s26, 1
      %p44 = por %p42, %p43
      %p45 = scmp.ne.s32.totalorder %s34, %s35
      %p46 = scmp.eq.s32.totalorder %s26, 0
      %p47 = por %p45, %p46
      %p48 = scmp.ne.s32.totalorder %s34, %s35
      %p49 = scmp.eq.s32.totalorder %s27, 1
      %p50 = por %p48, %p49
      %p52 = scmp.ne.s32.totalorder %s35, %s51
      %p53 = scmp.eq.s32.totalorder %s27, 0
      %p54 = por %p52, %p53
      %s56 = sadd.s32 %s55, 1
      %p59 = scmp.eq.s32.totalorder %s21, 1
      %p60 = scmp.ne.s32.totalorder %s55, %s57
      %p61 = scmp.eq.s32.totalorder %s21, 0
      %p62 = por %p60, %p61
      %p63 = scmp.ne.s32.totalorder %s55, %s57
      %p64 = scmp.eq.s32.totalorder %s26, 1
      %p65 = por %p63, %p64
      %p66 = scmp.ne.s32.totalorder %s57, %s58
      %p67 = scmp.eq.s32.totalorder %s26, 0
      %p68 = por %p66, %p67
      %p69 = scmp.ne.s32.totalorder %s57, %s58
      %p70 = scmp.eq.s32.totalorder %s27, 1
      %p71 = por %p69, %p70
      %p73 = scmp.ne.s32.totalorder %s58, %s72
      %p74 = scmp.eq.s32.totalorder %s27, 0
      %p75 = por %p73, %p74
      %s77 = sadd.s32 %s76, 1
      %p80 = scmp.eq.s32.totalorder %s21, 1
      %p81 = scmp.ne.s32.totalorder %s76, %s78
      %p82 = scmp.eq.s32.totalorder %s21, 0
      %p83 = por %p81, %p82
      %p84 = scmp.ne.s32.totalorder %s76, %s78
      %p85 = scmp.eq.s32.totalorder %s26, 1
      %p86 = por %p84, %p85
      %p87 = scmp.ne.s32.totalorder %s78, %s79
      %p88 = scmp.eq.s32.totalorder %s26, 0
      %p89 = por %p87, %p88
      %p90 = scmp.ne.s32.totalorder %s78, %s79
      %p91 = scmp.eq.s32.totalorder %s27, 1
      %p92 = por %p90, %p91
      %p94 = scmp.ne.s32.totalorder %s79, %s93
      %p95 = scmp.eq.s32.totalorder %s27, 0
      %p96 = por %p94, %p95
      %s98 = sadd.s32 %s97, 1
      %p101 = scmp.eq.s32.totalorder %s21, 1
      %p102 = scmp.ne.s32.totalorder %s97, %s99
      %p103 = scmp.eq.s32.totalorder %s21, 0
      %p104 = por %p102, %p103
      %p105 = scmp.ne.s32.totalorder %s97, %s99
      %p106 = scmp.eq.s32.totalorder %s26, 1
      %p107 = por %p105, %p106
      %p108 = scmp.ne.s32.totalorder %s99, %s100
      %p109 = scmp.eq.s32.totalorder %s26, 0
      %p110 = por %p108, %p109
      %p111 = scmp.ne.s32.totalorder %s99, %s100
      %p112 = scmp.eq.s32.totalorder %s27, 1
      %p113 = por %p111, %p112
      %p115 = scmp.ne.s32.totalorder %s100, %s114
      %p116 = scmp.eq.s32.totalorder %s27, 0
      %p117 = por %p115, %p116
      %s119 = sadd.s32 %s118, 1
      %p122 = scmp.eq.s32.totalorder %s21, 1
      %p123 = scmp.ne.s32.totalorder %s118, %s120
      %p124 = scmp.eq.s32.totalorder %s21, 0
      %p125 = por %p123, %p124
      %p126 = scmp.ne.s32.totalorder %s118, %s120
      %p127 = scmp.eq.s32.totalorder %s26, 1
      %p128 = por %p126, %p127
      %p129 = scmp.ne.s32.totalorder %s120, %s121
      %p130 = scmp.eq.s32.totalorder %s26, 0
      %p131 = por %p129, %p130
      %p132 = scmp.ne.s32.totalorder %s120, %s121
      %p133 = scmp.eq.s32.totalorder %s27, 1
      %p134 = por %p132, %p133
      %p136 = scmp.ne.s32.totalorder %s121, %s135
      %p137 = scmp.eq.s32.totalorder %s27, 0
      %p138 = por %p136, %p137
      %s140 = sadd.s32 %s139, 1
      %p143 = scmp.eq.s32.totalorder %s21, 1
      %p144 = scmp.ne.s32.totalorder %s139, %s141
      %p145 = scmp.eq.s32.totalorder %s21, 0
      %p146 = por %p144, %p145
      %p147 = scmp.ne.s32.totalorder %s139, %s141
      %p148 = scmp.eq.s32.totalorder %s26, 1
      %p149 = por %p147, %p148
      %p150 = scmp.ne.s32.totalorder %s141, %s142
      %p151 = scmp.eq.s32.totalorder %s26, 0
      %p152 = por %p150, %p151
      %p153 = scmp.ne.s32.totalorder %s141, %s142
      %p154 = scmp.eq.s32.totalorder %s27, 1
      %p155 = por %p153, %p154
      %p157 = scmp.ne.s32.totalorder %s142, %s156
      %p158 = scmp.eq.s32.totalorder %s27, 0
      %p159 = por %p157, %p158
      %s161 = sadd.s32 %s160, 1
      %p164 = scmp.eq.s32.totalorder %s21, 1
      %p165 = scmp.ne.s32.totalorder %s160, %s162
      %p166 = scmp.eq.s32.totalorder %s21, 0
      %p167 = por %p165, %p166
      %p168 = scmp.ne.s32.totalorder %s160, %s162
      %p169 = scmp.eq.s32.totalorder %s26, 1
      %p170 = por %p168, %p169
      %p171 = scmp.ne.s32.totalorder %s162, %s163
      %p172 = scmp.eq.s32.totalorder %s26, 0
      %p173 = por %p171, %p172
      %p174 = scmp.ne.s32.totalorder %s162, %s163
      %p175 = scmp.eq.s32.totalorder %s27, 1
      %p176 = por %p174, %p175
      %p178 = scmp.ne.s32.totalorder %s163, %s177
      %p179 = scmp.eq.s32.totalorder %s27, 0
      %p180 = por %p178, %p179
      %s182 = sadd.s32 %s181, 1
      %p185 = scmp.eq.s32.totalorder %s21, 1
      %p186 = scmp.ne.s32.totalorder %s181, %s183
      %p187 = scmp.eq.s32.totalorder %s21, 0
      %p188 = por %p186, %p187
      %p189 = scmp.ne.s32.totalorder %s181, %s183
      %p190 = scmp.eq.s32.totalorder %s26, 1
      %p191 = por %p189, %p190
      %p192 = scmp.ne.s32.totalorder %s183, %s184
      %p193 = scmp.eq.s32.totalorder %s26, 0
      %p194 = por %p192, %p193
      %p195 = scmp.ne.s32.totalorder %s183, %s184
      %p196 = scmp.eq.s32.totalorder %s27, 1
      %p197 = por %p195, %p196
      %p199 = scmp.ne.s32.totalorder %s184, %s198
      %p200 = scmp.eq.s32.totalorder %s27, 0
      %p201 = por %p199, %p200
      %s203 = sadd.s32 %s202, 1
      %p206 = scmp.eq.s32.totalorder %s21, 1
      %p207 = scmp.ne.s32.totalorder %s202, %s204
      %p208 = scmp.eq.s32.totalorder %s21, 0
      %p209 = por %p207, %p208
      %p210 = scmp.ne.s32.totalorder %s202, %s204
      %p211 = scmp.eq.s32.totalorder %s26, 1
      %p212 = por %p210, %p211
      %p213 = scmp.ne.s32.totalorder %s204, %s205
      %p214 = scmp.eq.s32.totalorder %s26, 0
      %p215 = por %p213, %p214
      %p216 = scmp.ne.s32.totalorder %s204, %s205
      %p217 = scmp.eq.s32.totalorder %s27, 1
      %p218 = por %p216, %p217
      %p220 = scmp.ne.s32.totalorder %s205, %s219
      %p221 = scmp.eq.s32.totalorder %s27, 0
      %p222 = por %p220, %p221
      %s224 = sadd.s32 %s223, 1
      %p227 = scmp.eq.s32.totalorder %s21, 1
      %p228 = scmp.ne.s32.totalorder %s223, %s225
      %p229 = scmp.eq.s32.totalorder %s21, 0
      %p230 = por %p228, %p229
      %p231 = scmp.ne.s32.totalorder %s223, %s225
      %p232 = scmp.eq.s32.totalorder %s26, 1
      %p233 = por %p231, %p232
      %p234 = scmp.ne.s32.totalorder %s225, %s226
      %p235 = scmp.eq.s32.totalorder %s26, 0
      %p236 = por %p234, %p235
      %p237 = scmp.ne.s32.totalorder %s225, %s226
      %p238 = scmp.eq.s32.totalorder %s27, 1
      %p239 = por %p237, %p238
      %p241 = scmp.ne.s32.totalorder %s226, %s240
      %p242 = scmp.eq.s32.totalorder %s27, 0
      %p243 = por %p241, %p242
      %s244 = ssub.s32 %s21, %s28
      %p245 = scmp.eq.s32.totalorder %s244, 0
      %s247 = sadd.s32 %s246, 1
      %s248 = scalar_select %p245, %s246, %s247
      %p251 = pneg %p245
      %p252 = scmp.eq.s32.totalorder %s21, 1
      %p253 = por %p251, %p252
      %p254 = scmp.ne.s32.totalorder %s246, %s249
      %p255 = scmp.eq.s32.totalorder %s21, 0
      %p256 = por %p254, %p255
      %p257 = scmp.ne.s32.totalorder %s246, %s249
      %p258 = scmp.eq.s32.totalorder %s26, 1
      %p259 = por %p257, %p258
      %p260 = scmp.ne.s32.totalorder %s249, %s250
      %p261 = scmp.eq.s32.totalorder %s26, 0
      %p262 = por %p260, %p261
      %p263 = scmp.ne.s32.totalorder %s249, %s250
      %p264 = scmp.eq.s32.totalorder %s27, 1
      %p265 = por %p263, %p264
      %p267 = scmp.ne.s32.totalorder %s250, %s266
      %p268 = scmp.eq.s32.totalorder %s27, 0
      %p269 = por %p267, %p268
      %p270 = scmp.le.s32.totalorder 1, %s21
      %p271 = scmp.lt.s32.totalorder %s21, 3
      %p272 = pnand %p270, %p271
      %p273 = pneg %p272
      // Predicated region
      $region9: #{tpu_custom_call.1} parent=5 // pred_check
        _
      $region10: #{tpu_custom_call.1} parent=5 // pred_check_branch
        %275 = sbr.rel (%p272) target = $region12
      $region11: #{tpu_custom_call.1} parent=5 // pred_region
        %s276 = ssub.s32 %s21, 1
        // Predicated region
        $region13: #{tpu_custom_call.1} parent=11 // pred_check
          %p277 = pneg %p68
        $region14: #{tpu_custom_call.1} parent=11 // pred_check_branch
          %279 = sbr.rel (%p277) target = $region16
        $region15: #{tpu_custom_call.1} parent=11 // pred_region
          _
        $region16: #{tpu_custom_call.1} parent=11 // pred_fallthru
          _
        // Predicated region
        $region17: #{tpu_custom_call.1} parent=11 // pred_check
          %p280 = pneg %p89
        $region18: #{tpu_custom_call.1} parent=11 // pred_check_branch
          %282 = sbr.rel (%p280) target = $region20
        $region19: #{tpu_custom_call.1} parent=11 // pred_region
          _
        $region20: #{tpu_custom_call.1} parent=11 // pred_fallthru
          _
        // Predicated region
        $region21: #{tpu_custom_call.1} parent=11 // pred_check
          %p283 = pneg %p110
        $region22: #{tpu_custom_call.1} parent=11 // pred_check_branch
          %285 = sbr.rel (%p283) target = $region24
        $region23: #{tpu_custom_call.1} parent=11 // pred_region
          _
        $region24: #{tpu_custom_call.1} parent=11 // pred_fallthru
          _
        // Predicated region
        $region25: #{tpu_custom_call.1} parent=11 // pred_check
          %p286 = pneg %p131
        $region26: #{tpu_custom_call.1} parent=11 // pred_check_branch
          %288 = sbr.rel (%p286) target = $region28
        $region27: #{tpu_custom_call.1} parent=11 // pred_region
          _
        $region28: #{tpu_custom_call.1} parent=11 // pred_fallthru
          _
        // Predicated region
        $region29: #{tpu_custom_call.1} parent=11 // pred_check
          %p289 = pneg %p152
        $region30: #{tpu_custom_call.1} parent=11 // pred_check_branch
          %291 = sbr.rel (%p289) target = $region32
        $region31: #{tpu_custom_call.1} parent=11 // pred_region
          %s293 = ssub.s32 8192, 8192
          %294 = vsyncadd [#allocation4], %s293
          %s295 = sshll.u32 [#allocation3], 4
          %s296 = int_to_ptr.vmem [resolvable:$true] %s295
          %301 = dma.hbm_to_vmem [thread:$0]  %s5, 8192, %s296, [#allocation4], 256, 256, 16
        $region32: #{tpu_custom_call.1} parent=11 // pred_fallthru
          _
        // Predicated region
        $region33: #{tpu_custom_call.1} parent=11 // pred_check
          %p302 = pneg %p173
        $region34: #{tpu_custom_call.1} parent=11 // pred_check_branch
          %304 = sbr.rel (%p302) target = $region36
        $region35: #{tpu_custom_call.1} parent=11 // pred_region
          %s306 = ssub.s32 8192, 8192
          %307 = vsyncadd [#allocation7], %s306
          %s308 = sshll.u32 [#allocation6], 4
          %s309 = int_to_ptr.vmem [resolvable:$true] %s308
          %314 = dma.hbm_to_vmem [thread:$0]  %s6, 8192, %s309, [#allocation7], 256, 256, 16
        $region36: #{tpu_custom_call.1} parent=11 // pred_fallthru
          _
        // Predicated region
        $region37: #{tpu_custom_call.1} parent=11 // pred_check
          %p315 = pneg %p194
        $region38: #{tpu_custom_call.1} parent=11 // pred_check_branch
          %317 = sbr.rel (%p315) target = $region40
        $region39: #{tpu_custom_call.1} parent=11 // pred_region
          _
        $region40: #{tpu_custom_call.1} parent=11 // pred_fallthru
          _
        // Predicated region
        $region41: #{tpu_custom_call.1} parent=11 // pred_check
          %p318 = pneg %p215
        $region42: #{tpu_custom_call.1} parent=11 // pred_check_branch
          %320 = sbr.rel (%p318) target = $region44
        $region43: #{tpu_custom_call.1} parent=11 // pred_region
          _
        $region44: #{tpu_custom_call.1} parent=11 // pred_fallthru
          _
        // Predicated region
        $region45: #{tpu_custom_call.1} parent=11 // pred_check
          %p321 = pneg %p236
        $region46: #{tpu_custom_call.1} parent=11 // pred_check_branch
          %323 = sbr.rel (%p321) target = $region48
        $region47: #{tpu_custom_call.1} parent=11 // pred_region
          _
        $region48: #{tpu_custom_call.1} parent=11 // pred_fallthru
          _
      $region12: #{tpu_custom_call.1} parent=5 // pred_fallthru
        _
      %p324 = scmp.lt.s32.totalorder %s21, 2
      // Predicated region
      $region49: #{tpu_custom_call.1} parent=5 // pred_check
        %p325 = pneg %p324
      $region50: #{tpu_custom_call.1} parent=5 // pred_check_branch
        %327 = sbr.rel (%p325) target = $region52
      $region51: #{tpu_custom_call.1} parent=5 // pred_region
        // Predicated region
        $region53: #{tpu_custom_call.1} parent=51 // pred_check
          %p328 = pneg %p41
        $region54: #{tpu_custom_call.1} parent=51 // pred_check_branch
          %330 = sbr.rel (%p328) target = $region56
        $region55: #{tpu_custom_call.1} parent=51 // pred_region
          %s331 = sand.u32 %s31, 1
          %s332 = sand.u32 %s31, 1
          %s333 = smul.addr %s332, 128
          %s334 = scalar_lea.vmem [#allocation2], %s333
          %s335 = smul.addr %s21, 8
          %s336 = scalar_lea.vmem %s0, %s335
          // Predicated region
          $region57: #{tpu_custom_call.1} parent=55 // pred_check
            _
          $region58: #{tpu_custom_call.1} parent=55 // pred_check_branch
            %338 = sbr.rel (0) target = $region60
          $region59: #{tpu_custom_call.1} parent=55 // pred_region
            // Predicated region
            $region61: #{tpu_custom_call.1} parent=59 // pred_check
              _
            $region62: #{tpu_custom_call.1} parent=59 // pred_check_branch
              %340 = sbr.rel (0) target = $region64
            $region63: #{tpu_custom_call.1} parent=59 // pred_region
              // Predicated region
              $region76: #{tpu_custom_call.1} parent=63 // pred_check
                _
              $region77: #{tpu_custom_call.1} parent=63 // pred_check_branch
                %385 = sbr.rel (0) target = $region79
              $region78: #{tpu_custom_call.1} parent=63 // pred_region
                loop: start=0, step=1, limit=1
                $region80: #{tpu_custom_call.1} parent=78 // loop_pre_header
                  _
                $region81: #{tpu_custom_call.1} parent=78 // loop_header
                  %s387 = sphi 0, %s391
                  %p388 = scmp.ge.s32.totalorder %s387, 1
                  %s392 = sphi %s336, %s336
                  %s393 = sphi %s334, %s334
                $region82: #{tpu_custom_call.1} parent=78 // loop_header_branch
                  %390 = sbr.rel (%p388) target = $region86
                $region83: #{tpu_custom_call.1} parent=78 // loop_body
                  %v394 = vld [vmem:[%s392] sm:$0xff]
                  %395 = vst [vmem:[%s393] sm:$0xff] %v394
                  %v396 = vld [vmem:[%s392 + $0x10] sm:$0xff]
                  %397 = vst [vmem:[%s393 + $0x8] sm:$0xff] %v396
                  %v398 = vld [vmem:[%s392 + $0x20] sm:$0xff]
                  %399 = vst [vmem:[%s393 + $0x10] sm:$0xff] %v398
                  %v400 = vld [vmem:[%s392 + $0x30] sm:$0xff]
                  %401 = vst [vmem:[%s393 + $0x18] sm:$0xff] %v400
                  %v402 = vld [vmem:[%s392 + $0x40] sm:$0xff]
                  %403 = vst [vmem:[%s393 + $0x20] sm:$0xff] %v402
                  %v404 = vld [vmem:[%s392 + $0x50] sm:$0xff]
                  %405 = vst [vmem:[%s393 + $0x28] sm:$0xff] %v404
                  %v406 = vld [vmem:[%s392 + $0x60] sm:$0xff]
                  %407 = vst [vmem:[%s393 + $0x30] sm:$0xff] %v406
                  %v408 = vld [vmem:[%s392 + $0x70] sm:$0xff]
                  %409 = vst [vmem:[%s393 + $0x38] sm:$0xff] %v408
                  %v410 = vld [vmem:[%s392 + $0x80] sm:$0xff]
                  %411 = vst [vmem:[%s393 + $0x40] sm:$0xff] %v410
                  %v412 = vld [vmem:[%s392 + $0x90] sm:$0xff]
                  %413 = vst [vmem:[%s393 + $0x48] sm:$0xff] %v412
                  %v414 = vld [vmem:[%s392 + $0xa0] sm:$0xff]
                  %415 = vst [vmem:[%s393 + $0x50] sm:$0xff] %v414
                  %v416 = vld [vmem:[%s392 + $0xb0] sm:$0xff]
                  %417 = vst [vmem:[%s393 + $0x58] sm:$0xff] %v416
                  %v418 = vld [vmem:[%s392 + $0xc0] sm:$0xff]
                  %419 = vst [vmem:[%s393 + $0x60] sm:$0xff] %v418
                  %v420 = vld [vmem:[%s392 + $0xd0] sm:$0xff]
                  %421 = vst [vmem:[%s393 + $0x68] sm:$0xff] %v420
                  %v422 = vld [vmem:[%s392 + $0xe0] sm:$0xff]
                  %423 = vst [vmem:[%s393 + $0x70] sm:$0xff] %v422
                  %v424 = vld [vmem:[%s392 + $0xf0] sm:$0xff]
                  %425 = vst [vmem:[%s393 + $0x78] sm:$0xff] %v424
                $region84: #{tpu_custom_call.1} parent=78 // loop_footer
                  %s391 = sadd.s32 1, %s387
                $region85: #{tpu_custom_call.1} parent=78 // loop_footer_branch
                  %386 = sbr.rel target = $region81
                $region86: #{tpu_custom_call.1} parent=78 // loop_exit
                  _
              $region79: #{tpu_custom_call.1} parent=63 // pred_fallthru
                _
              // Predicated region
              $region87: #{tpu_custom_call.1} parent=63 // pred_check
                _
              $region88: #{tpu_custom_call.1} parent=63 // pred_check_branch
                %427 = sbr.rel target = $region90
              $region89: #{tpu_custom_call.1} parent=63 // pred_region
                _
              $region90: #{tpu_custom_call.1} parent=63 // pred_fallthru
                _
            $region64: #{tpu_custom_call.1} parent=59 // pred_fallthru
              _
            // Predicated region
            $region65: #{tpu_custom_call.1} parent=59 // pred_check
              _
            $region66: #{tpu_custom_call.1} parent=59 // pred_check_branch
              %342 = sbr.rel target = $region68
            $region67: #{tpu_custom_call.1} parent=59 // pred_region
              loop: start=0, step=1, limit=1
              $region69: #{tpu_custom_call.1} parent=67 // loop_pre_header
                _
              $region70: #{tpu_custom_call.1} parent=67 // loop_header
                %s345 = sphi 0, %s349
                %p346 = scmp.ge.s32.totalorder %s345, 1
                %s350 = sphi %s336, %s336
                %s351 = sphi %s334, %s334
              $region71: #{tpu_custom_call.1} parent=67 // loop_header_branch
                %348 = sbr.rel (%p346) target = $region75
              $region72: #{tpu_custom_call.1} parent=67 // loop_body
                %v352 = vld [vmem:[%s350] sm:$0xff]
                %353 = vst [vmem:[%s351] sm:$0xff] %v352
                %v354 = vld [vmem:[%s350 + $0x10] sm:$0xff]
                %355 = vst [vmem:[%s351 + $0x8] sm:$0xff] %v354
                %v356 = vld [vmem:[%s350 + $0x20] sm:$0xff]
                %357 = vst [vmem:[%s351 + $0x10] sm:$0xff] %v356
                %v358 = vld [vmem:[%s350 + $0x30] sm:$0xff]
                %359 = vst [vmem:[%s351 + $0x18] sm:$0xff] %v358
                %v360 = vld [vmem:[%s350 + $0x40] sm:$0xff]
                %361 = vst [vmem:[%s351 + $0x20] sm:$0xff] %v360
                %v362 = vld [vmem:[%s350 + $0x50] sm:$0xff]
                %363 = vst [vmem:[%s351 + $0x28] sm:$0xff] %v362
                %v364 = vld [vmem:[%s350 + $0x60] sm:$0xff]
                %365 = vst [vmem:[%s351 + $0x30] sm:$0xff] %v364
                %v366 = vld [vmem:[%s350 + $0x70] sm:$0xff]
                %367 = vst [vmem:[%s351 + $0x38] sm:$0xff] %v366
                %v368 = vld [vmem:[%s350 + $0x80] sm:$0xff]
                %369 = vst [vmem:[%s351 + $0x40] sm:$0xff] %v368
                %v370 = vld [vmem:[%s350 + $0x90] sm:$0xff]
                %371 = vst [vmem:[%s351 + $0x48] sm:$0xff] %v370
                %v372 = vld [vmem:[%s350 + $0xa0] sm:$0xff]
                %373 = vst [vmem:[%s351 + $0x50] sm:$0xff] %v372
                %v374 = vld [vmem:[%s350 + $0xb0] sm:$0xff]
                %375 = vst [vmem:[%s351 + $0x58] sm:$0xff] %v374
                %v376 = vld [vmem:[%s350 + $0xc0] sm:$0xff]
                %377 = vst [vmem:[%s351 + $0x60] sm:$0xff] %v376
                %v378 = vld [vmem:[%s350 + $0xd0] sm:$0xff]
                %379 = vst [vmem:[%s351 + $0x68] sm:$0xff] %v378
                %v380 = vld [vmem:[%s350 + $0xe0] sm:$0xff]
                %381 = vst [vmem:[%s351 + $0x70] sm:$0xff] %v380
                %v382 = vld [vmem:[%s350 + $0xf0] sm:$0xff]
                %383 = vst [vmem:[%s351 + $0x78] sm:$0xff] %v382
              $region73: #{tpu_custom_call.1} parent=67 // loop_footer
                %s349 = sadd.s32 1, %s345
              $region74: #{tpu_custom_call.1} parent=67 // loop_footer_branch
                %344 = sbr.rel target = $region70
              $region75: #{tpu_custom_call.1} parent=67 // loop_exit
                _
            $region68: #{tpu_custom_call.1} parent=59 // pred_fallthru
              _
          $region60: #{tpu_custom_call.1} parent=55 // pred_fallthru
            _
          %428 = vnop
        $region56: #{tpu_custom_call.1} parent=51 // pred_fallthru
          _
      $region52: #{tpu_custom_call.1} parent=5 // pred_fallthru
        _
      %p429 = scmp.le.s32.totalorder 1, %s21
      %p430 = scmp.lt.s32.totalorder %s21, 3
      %p431 = pnand %p429, %p430
      %p432 = pneg %p431
      // Predicated region
      $region91: #{tpu_custom_call.1} parent=5 // pred_check
        _
      $region92: #{tpu_custom_call.1} parent=5 // pred_check_branch
        %434 = sbr.rel (%p431) target = $region94
      $region93: #{tpu_custom_call.1} parent=5 // pred_region
        %s435 = ssub.s32 %s21, 1
        %s436 = sand.u32 %s34, 1
        %s437 = sand.u32 %s34, 1
        %s438 = smul.addr %s437, 128
        %s439 = scalar_lea.vmem [#allocation2], %s438
        // Predicated region
        $region95: #{tpu_custom_call.1} parent=93 // pred_check
          %p440 = pneg %p47
        $region96: #{tpu_custom_call.1} parent=93 // pred_check_branch
          %442 = sbr.rel (%p440) target = $region98
        $region97: #{tpu_custom_call.1} parent=93 // pred_region
          _
        $region98: #{tpu_custom_call.1} parent=93 // pred_fallthru
          _
        // Predicated region
        $region99: #{tpu_custom_call.1} parent=93 // pred_check
          %p443 = pneg %p152
        $region100: #{tpu_custom_call.1} parent=93 // pred_check_branch
          %445 = sbr.rel (%p443) target = $region102
        $region101: #{tpu_custom_call.1} parent=93 // pred_region
          %446 = dma.done [#allocation4], 8192
        $region102: #{tpu_custom_call.1} parent=93 // pred_fallthru
          _
        // Predicated region
        $region103: #{tpu_custom_call.1} parent=93 // pred_check
          %p447 = pneg %p173
        $region104: #{tpu_custom_call.1} parent=93 // pred_check_branch
          %449 = sbr.rel (%p447) target = $region106
        $region105: #{tpu_custom_call.1} parent=93 // pred_region
          %450 = dma.done [#allocation7], 8192
        $region106: #{tpu_custom_call.1} parent=93 // pred_fallthru
          _
        %s451 = sand.u32 %s34, 1
        %s452 = sand.u32 %s34, 1
        %s453 = smul.addr %s452, 128
        %s454 = scalar_lea.vmem [#allocation2], %s453
        %p455 = pneg %p47
        %p456 = pneg %p44
        %p457 = pneg %p68
        %p458 = pneg %p65
        %p459 = pneg %p89
        %p460 = pneg %p86
        %p461 = pneg %p110
        %p462 = pneg %p107
        %p463 = pneg %p131
        %p464 = pneg %p128
        %p465 = pneg %p152
        %p466 = pneg %p149
        %p467 = pneg %p173
        %p468 = pneg %p170
        %p469 = pneg %p194
        %p470 = pneg %p191
        %p471 = pneg %p215
        %p472 = pneg %p212
        %p473 = pneg %p236
        %p474 = pneg %p233
        %p475 = pneg %p262
        %p476 = pneg %p259
        %s477 = sand.u32 %s249, 1
        %s478 = scalar_lea.sflag [#allocation5], %s477
        %s479 = sand.u32 %s249, 1
        %s480 = smul.addr %s479, 8
        %s481 = scalar_lea.vmem [#allocation8], %s480
        %v483 = vld [vmem:[%s439] sm:$0xff]
        %v484 = vld [vmem:[%s439 + $0x8] sm:$0xff]
        %v485 = vld [vmem:[%s439 + $0x10] sm:$0xff]
        %v486 = vld [vmem:[%s439 + $0x18] sm:$0xff]
        %v487 = vld [vmem:[%s439 + $0x20] sm:$0xff]
        %v488 = vld [vmem:[%s439 + $0x28] sm:$0xff]
        %v489 = vld [vmem:[%s439 + $0x30] sm:$0xff]
        %v490 = vld [vmem:[%s439 + $0x38] sm:$0xff]
        %v491 = vld [vmem:[%s439 + $0x40] sm:$0xff]
        %v492 = vld [vmem:[%s439 + $0x48] sm:$0xff]
        %v493 = vld [vmem:[%s439 + $0x50] sm:$0xff]
        %v494 = vld [vmem:[%s439 + $0x58] sm:$0xff]
        %v495 = vld [vmem:[%s439 + $0x60] sm:$0xff]
        %v496 = vld [vmem:[%s439 + $0x68] sm:$0xff]
        %v497 = vld [vmem:[%s439 + $0x70] sm:$0xff]
        %v498 = vld [vmem:[%s439 + $0x78] sm:$0xff]
        %v499 = vpack.c.bf16 %v484, %v483
        %v500 = vpack.c.bf16 %v486, %v485
        %v501 = vpack.c.bf16 %v488, %v487
        %v502 = vpack.c.bf16 %v490, %v489
        %v503 = vpack.c.bf16 %v492, %v491
        %v504 = vpack.c.bf16 %v494, %v493
        %v505 = vpack.c.bf16 %v496, %v495
        %v506 = vpack.c.bf16 %v498, %v497
        %v507 = vld [vmem:[%s1] sm:$0xf]
        %v508 = vld [vmem:[%s2] sm:$0x1]
        %v510 = vlaneseq
        %v511 = vshrl.u32 %v510, 7
        %v512 = vsub.s32 0, %v511
        %v513 = vrot.slane %v508, %v512
        %vm515 = vcmask 64512
        %v517 = vsel %vm515, %v499, 0
        %v520 = vsel %vm515, %v500, 0
        %v523 = vsel %vm515, %v501, 0
        %v526 = vsel %vm515, %v502, 0
        %v529 = vsel %vm515, %v503, 0
        %v532 = vsel %vm515, %v504, 0
        %v535 = vsel %vm515, %v505, 0
        %v538 = vsel %vm515, %v506, 0
        %vm540 = vcmask 1043456
        %v542 = vsel %vm540, %v507, 0
        %544 = vmatprep.subr.bf16.mxu0 0
        %545 = vmatpush1.bf16.msra.mxu0 %v542
        %546 = vmatprep.subr.bf16.mxu0 0
        %547 = vmatpush1.bf16.msra.mxu0 0
        %548 = vmatprep.subr.bf16.mxu0 0
        %549 = vmatpush1.bf16.msra.mxu0 0
        %550 = vmatprep.subr.bf16.mxu0 0
        %551 = vmatpush1.bf16.msra.mxu0 0
        %552 = vmatprep.subr.bf16.mxu0 0
        %553 = vmatpush1.bf16.msra.mxu0 0
        %554 = vmatprep.subr.bf16.mxu0 0
        %555 = vmatpush1.bf16.msra.mxu0 0
        %556 = vmatprep.subr.bf16.mxu0 0
        %557 = vmatpush1.bf16.msra.mxu0 0
        %558 = vmatprep.subr.bf16.mxu0 0
        %559 = vmatpush1.bf16.msra.mxu0 0
        %560 = vmatprep.subr.bf16.mxu0 0
        %561 = vmatpush1.bf16.msra.mxu0 0
        %562 = vmatprep.subr.bf16.mxu0 0
        %563 = vmatpush1.bf16.msra.mxu0 0
        %564 = vmatprep.subr.bf16.mxu0 0
        %565 = vmatpush1.bf16.msra.mxu0 0
        %566 = vmatprep.subr.bf16.mxu0 0
        %567 = vmatpush1.bf16.msra.mxu0 0
        %568 = vmatprep.subr.bf16.mxu0 0
        %569 = vmatpush1.bf16.msra.mxu0 0
        %570 = vmatprep.subr.bf16.mxu0 0
        %571 = vmatpush1.bf16.msra.mxu0 0
        %572 = vmatprep.subr.bf16.mxu0 0
        %573 = vmatpush1.bf16.msra.mxu0 0
        %574 = vmatprep.subr.bf16.mxu0 0
        %575 = vmatpush1.bf16.msra.mxu0 0
        %576 = vmatprep.mubr.bf16.mxu0 0
        %577 = vmatmul.mubr.bf16.gmra.mrb[0].mxu0 %v517
        %v578 = vpop.f32.mrb[0].mxu0
        %v579 = vadd.f32 %v513, %v578
        %v580 = vpop.f32.mrb[0].mxu0
        %v581 = vpop.f32.mrb[0].mxu0
        %v582 = vadd.f32 %v513, %v581
        %v583 = vpop.f32.mrb[0].mxu0
        %584 = vmatprep.mubr.bf16.mxu0 0
        %585 = vmatmul.mubr.bf16.gmra.mrb[0].mxu0 %v520
        %v586 = vpop.f32.mrb[0].mxu0
        %v587 = vadd.f32 %v513, %v586
        %v588 = vpop.f32.mrb[0].mxu0
        %v589 = vpop.f32.mrb[0].mxu0
        %v590 = vadd.f32 %v513, %v589
        %v591 = vpop.f32.mrb[0].mxu0
        %592 = vmatprep.mubr.bf16.mxu0 0
        %593 = vmatmul.mubr.bf16.gmra.mrb[0].mxu0 %v523
        %v594 = vpop.f32.mrb[0].mxu0
        %v595 = vadd.f32 %v513, %v594
        %v596 = vpop.f32.mrb[0].mxu0
        %v597 = vpop.f32.mrb[0].mxu0
        %v598 = vadd.f32 %v513, %v597
        %v599 = vpop.f32.mrb[0].mxu0
        %600 = vmatprep.mubr.bf16.mxu0 0
        %601 = vmatmul.mubr.bf16.gmra.mrb[0].mxu0 %v526
        %v602 = vpop.f32.mrb[0].mxu0
        %v603 = vadd.f32 %v513, %v602
        %v604 = vpop.f32.mrb[0].mxu0
        %v605 = vpop.f32.mrb[0].mxu0
        %v606 = vadd.f32 %v513, %v605
        %v607 = vpop.f32.mrb[0].mxu0
        %608 = vmatprep.mubr.bf16.mxu0 0
        %609 = vmatmul.mubr.bf16.gmra.mrb[0].mxu0 %v529
        %v610 = vpop.f32.mrb[0].mxu0
        %v611 = vadd.f32 %v513, %v610
        %v612 = vpop.f32.mrb[0].mxu0
        %v613 = vpop.f32.mrb[0].mxu0
        %v614 = vadd.f32 %v513, %v613
        %v615 = vpop.f32.mrb[0].mxu0
        %616 = vmatprep.mubr.bf16.mxu0 0
        %617 = vmatmul.mubr.bf16.gmra.mrb[0].mxu0 %v532
        %v618 = vpop.f32.mrb[0].mxu0
        %v619 = vadd.f32 %v513, %v618
        %v620 = vpop.f32.mrb[0].mxu0
        %v621 = vpop.f32.mrb[0].mxu0
        %v622 = vadd.f32 %v513, %v621
        %v623 = vpop.f32.mrb[0].mxu0
        %624 = vmatprep.mubr.bf16.mxu0 0
        %625 = vmatmul.mubr.bf16.gmra.mrb[0].mxu0 %v535
        %v626 = vpop.f32.mrb[0].mxu0
        %v627 = vadd.f32 %v513, %v626
        %v628 = vpop.f32.mrb[0].mxu0
        %v629 = vpop.f32.mrb[0].mxu0
        %v630 = vadd.f32 %v513, %v629
        %v631 = vpop.f32.mrb[0].mxu0
        %632 = vmatprep.mubr.bf16.mxu0 0
        %633 = vmatmul.mubr.bf16.gmra.mrb[0].mxu0 %v538
        %v634 = vpop.f32.mrb[0].mxu0
        %v635 = vadd.f32 %v513, %v634
        %v636 = vpop.f32.mrb[0].mxu0
        %v637 = vpop.f32.mrb[0].mxu0
        %v638 = vadd.f32 %v513, %v637
        %v639 = vpop.f32.mrb[0].mxu0
        %640 = vdwg.mxu0
        %v641 = vmax.f32 %v579, 0.0
        %v642 = vmax.f32 %v582, 0.0
        %v643 = vmax.f32 %v587, 0.0
        %v644 = vmax.f32 %v590, 0.0
        %v645 = vmax.f32 %v595, 0.0
        %v646 = vmax.f32 %v598, 0.0
        %v647 = vmax.f32 %v603, 0.0
        %v648 = vmax.f32 %v606, 0.0
        %v649 = vmax.f32 %v611, 0.0
        %v650 = vmax.f32 %v614, 0.0
        %v651 = vmax.f32 %v619, 0.0
        %v652 = vmax.f32 %v622, 0.0
        %v653 = vmax.f32 %v627, 0.0
        %v654 = vmax.f32 %v630, 0.0
        %v655 = vmax.f32 %v635, 0.0
        %v656 = vmax.f32 %v638, 0.0
        %v657 = vpack.c.bf16 %v642, %v641
        %v658 = vpack.c.bf16 %v644, %v643
        %v659 = vpack.c.bf16 %v646, %v645
        %v660 = vpack.c.bf16 %v648, %v647
        %v661 = vpack.c.bf16 %v650, %v649
        %v662 = vpack.c.bf16 %v652, %v651
        %v663 = vpack.c.bf16 %v654, %v653
        %v664 = vpack.c.bf16 %v656, %v655
        %v665 = vld [vmem:[%s3] sm:$0xff]
        %v666 = vld [vmem:[%s3 + $0x8] sm:$0xff]
        %v667 = vld [vmem:[%s3 + $0x10] sm:$0xff]
        %v668 = vld [vmem:[%s3 + $0x18] sm:$0xff]
        %v669 = vld [vmem:[%s3 + $0x20] sm:$0xff]
        %v670 = vld [vmem:[%s3 + $0x28] sm:$0xff]
        %v671 = vld [vmem:[%s3 + $0x30] sm:$0xff]
        %v672 = vld [vmem:[%s3 + $0x38] sm:$0xff]
        %v673 = vld [vmem:[%s3 + $0x40] sm:$0xff]
        %v674 = vld [vmem:[%s3 + $0x48] sm:$0xff]
        %v675 = vld [vmem:[%s3 + $0x50] sm:$0xff]
        %v676 = vld [vmem:[%s3 + $0x58] sm:$0xff]
        %v677 = vld [vmem:[%s3 + $0x60] sm:$0xff]
        %v678 = vld [vmem:[%s3 + $0x68] sm:$0xff]
        %v679 = vld [vmem:[%s3 + $0x70] sm:$0xff]
        %v680 = vld [vmem:[%s3 + $0x78] sm:$0xff]
        %v681 = vld [vmem:[%s4] sm:$0x3]
        %v683 = vlaneseq
        %v684 = vshrl.u32 %v683, 7
        %v685 = vsub.s32 0, %v684
        %v686 = vrot.slane %v681, %v685
        %v687 = vlaneseq
        %v688 = vshrl.u32 %v687, 7
        %v689 = vsub.s32 1, %v688
        %v690 = vrot.slane %v681, %v689
        %v709 = vunpack.c.l.b16 %v665
        %v710 = vunpack.c.h.b16 %v665
        %v711 = vunpack.c.l.b16 %v666
        %v712 = vunpack.c.h.b16 %v666
        %v713 = vunpack.c.l.b16 %v667
        %v714 = vunpack.c.h.b16 %v667
        %v715 = vunpack.c.l.b16 %v668
        %v716 = vunpack.c.h.b16 %v668
        %v717 = vunpack.c.l.b16 %v669
        %v718 = vunpack.c.h.b16 %v669
        %v719 = vunpack.c.l.b16 %v670
        %v720 = vunpack.c.h.b16 %v670
        %v721 = vunpack.c.l.b16 %v671
        %v722 = vunpack.c.h.b16 %v671
        %v723 = vunpack.c.l.b16 %v672
        %v724 = vunpack.c.h.b16 %v672
        %v725 = vunpack.c.l.b16 %v673
        %v726 = vunpack.c.h.b16 %v673
        %v727 = vunpack.c.l.b16 %v674
        %v728 = vunpack.c.h.b16 %v674
        %v729 = vunpack.c.l.b16 %v675
        %v730 = vunpack.c.h.b16 %v675
        %v731 = vunpack.c.l.b16 %v676
        %v732 = vunpack.c.h.b16 %v676
        %v733 = vunpack.c.l.b16 %v677
        %v734 = vunpack.c.h.b16 %v677
        %v735 = vunpack.c.l.b16 %v678
        %v736 = vunpack.c.h.b16 %v678
        %v737 = vunpack.c.l.b16 %v679
        %v738 = vunpack.c.h.b16 %v679
        %v739 = vunpack.c.l.b16 %v680
        %v740 = vunpack.c.h.b16 %v680
        %v741 = vpack.c.b16 %v711, %v709
        %v742 = vpack.c.b16 %v712, %v710
        %v743 = vpack.c.b16 %v715, %v713
        %v744 = vpack.c.b16 %v716, %v714
        %v745 = vpack.c.b16 %v719, %v717
        %v746 = vpack.c.b16 %v720, %v718
        %v747 = vpack.c.b16 %v723, %v721
        %v748 = vpack.c.b16 %v724, %v722
        %v749 = vpack.c.b16 %v727, %v725
        %v750 = vpack.c.b16 %v728, %v726
        %v751 = vpack.c.b16 %v731, %v729
        %v752 = vpack.c.b16 %v732, %v730
        %v753 = vpack.c.b16 %v735, %v733
        %v754 = vpack.c.b16 %v736, %v734
        %v755 = vpack.c.b16 %v739, %v737
        %v756 = vpack.c.b16 %v740, %v738
        %773 = vmatprep.subr.bf16.mxu0 %v742
        %774 = vmatpush1.bf16.msra.mxu0 %v741
        %775 = vmatprep.subr.bf16.mxu0 %v744
        %776 = vmatpush1.bf16.msra.mxu0 %v743
        %777 = vmatprep.subr.bf16.mxu0 %v746
        %778 = vmatpush1.bf16.msra.mxu0 %v745
        %779 = vmatprep.subr.bf16.mxu0 %v748
        %780 = vmatpush1.bf16.msra.mxu0 %v747
        %781 = vmatprep.subr.bf16.mxu0 %v750
        %782 = vmatpush1.bf16.msra.mxu0 %v749
        %783 = vmatprep.subr.bf16.mxu0 %v752
        %784 = vmatpush1.bf16.msra.mxu0 %v751
        %785 = vmatprep.subr.bf16.mxu0 %v754
        %786 = vmatpush1.bf16.msra.mxu0 %v753
        %787 = vmatprep.subr.bf16.mxu0 %v756
        %788 = vmatpush1.bf16.msra.mxu0 %v755
        %789 = vmatprep.subr.bf16.mxu0 0
        %790 = vmatpush1.bf16.msra.mxu0 0
        %791 = vmatprep.subr.bf16.mxu0 0
        %792 = vmatpush1.bf16.msra.mxu0 0
        %793 = vmatprep.subr.bf16.mxu0 0
        %794 = vmatpush1.bf16.msra.mxu0 0
        %795 = vmatprep.subr.bf16.mxu0 0
        %796 = vmatpush1.bf16.msra.mxu0 0
        %797 = vmatprep.subr.bf16.mxu0 0
        %798 = vmatpush1.bf16.msra.mxu0 0
        %799 = vmatprep.subr.bf16.mxu0 0
        %800 = vmatpush1.bf16.msra.mxu0 0
        %801 = vmatprep.subr.bf16.mxu0 0
        %802 = vmatpush1.bf16.msra.mxu0 0
        %803 = vmatprep.subr.bf16.mxu0 0
        %804 = vmatpush1.bf16.msra.mxu0 0
        %805 = vmatprep.mubr.bf16.mxu0 0
        %806 = vmatmul.mubr.bf16.gmra.mrb[0].mxu0 %v657
        %v807 = vpop.f32.mrb[0].mxu0
        %v808 = vadd.f32 %v686, %v807
        %v809 = vpop.f32.mrb[0].mxu0
        %v810 = vadd.f32 %v690, %v809
        %v811 = vpop.f32.mrb[0].mxu0
        %v812 = vadd.f32 %v686, %v811
        %v813 = vpop.f32.mrb[0].mxu0
        %v814 = vadd.f32 %v690, %v813
        %815 = vmatprep.mubr.bf16.mxu0 0
        %816 = vmatmul.mubr.bf16.gmra.mrb[0].mxu0 %v658
        %v817 = vpop.f32.mrb[0].mxu0
        %v818 = vadd.f32 %v686, %v817
        %v819 = vpop.f32.mrb[0].mxu0
        %v820 = vadd.f32 %v690, %v819
        %v821 = vpop.f32.mrb[0].mxu0
        %v822 = vadd.f32 %v686, %v821
        %v823 = vpop.f32.mrb[0].mxu0
        %v824 = vadd.f32 %v690, %v823
        %825 = vmatprep.mubr.bf16.mxu0 0
        %826 = vmatmul.mubr.bf16.gmra.mrb[0].mxu0 %v659
        %v827 = vpop.f32.mrb[0].mxu0
        %v828 = vadd.f32 %v686, %v827
        %v829 = vpop.f32.mrb[0].mxu0
        %v830 = vadd.f32 %v690, %v829
        %v831 = vpop.f32.mrb[0].mxu0
        %v832 = vadd.f32 %v686, %v831
        %v833 = vpop.f32.mrb[0].mxu0
        %v834 = vadd.f32 %v690, %v833
        %835 = vmatprep.mubr.bf16.mxu0 0
        %836 = vmatmul.mubr.bf16.gmra.mrb[0].mxu0 %v660
        %v837 = vpop.f32.mrb[0].mxu0
        %v838 = vadd.f32 %v686, %v837
        %v839 = vpop.f32.mrb[0].mxu0
        %v840 = vadd.f32 %v690, %v839
        %v841 = vpop.f32.mrb[0].mxu0
        %v842 = vadd.f32 %v686, %v841
        %v843 = vpop.f32.mrb[0].mxu0
        %v844 = vadd.f32 %v690, %v843
        %845 = vmatprep.mubr.bf16.mxu0 0
        %846 = vmatmul.mubr.bf16.gmra.mrb[0].mxu0 %v661
        %v847 = vpop.f32.mrb[0].mxu0
        %v848 = vadd.f32 %v686, %v847
        %v849 = vpop.f32.mrb[0].mxu0
        %v850 = vadd.f32 %v690, %v849
        %v851 = vpop.f32.mrb[0].mxu0
        %v852 = vadd.f32 %v686, %v851
        %v853 = vpop.f32.mrb[0].mxu0
        %v854 = vadd.f32 %v690, %v853
        %855 = vmatprep.mubr.bf16.mxu0 0
        %856 = vmatmul.mubr.bf16.gmra.mrb[0].mxu0 %v662
        %v857 = vpop.f32.mrb[0].mxu0
        %v858 = vadd.f32 %v686, %v857
        %v859 = vpop.f32.mrb[0].mxu0
        %v860 = vadd.f32 %v690, %v859
        %v861 = vpop.f32.mrb[0].mxu0
        %v862 = vadd.f32 %v686, %v861
        %v863 = vpop.f32.mrb[0].mxu0
        %v864 = vadd.f32 %v690, %v863
        %865 = vmatprep.mubr.bf16.mxu0 0
        %866 = vmatmul.mubr.bf16.gmra.mrb[0].mxu0 %v663
        %v867 = vpop.f32.mrb[0].mxu0
        %v868 = vadd.f32 %v686, %v867
        %v869 = vpop.f32.mrb[0].mxu0
        %v870 = vadd.f32 %v690, %v869
        %v871 = vpop.f32.mrb[0].mxu0
        %v872 = vadd.f32 %v686, %v871
        %v873 = vpop.f32.mrb[0].mxu0
        %v874 = vadd.f32 %v690, %v873
        %875 = vmatprep.mubr.bf16.mxu0 0
        %876 = vmatmul.mubr.bf16.gmra.mrb[0].mxu0 %v664
        %v877 = vpop.f32.mrb[0].mxu0
        %v878 = vadd.f32 %v686, %v877
        %v879 = vpop.f32.mrb[0].mxu0
        %v880 = vadd.f32 %v690, %v879
        %v881 = vpop.f32.mrb[0].mxu0
        %v882 = vadd.f32 %v686, %v881
        %v883 = vpop.f32.mrb[0].mxu0
        %v884 = vadd.f32 %v690, %v883
        %885 = vdwg.mxu0
        %v886 = vpack.c.bf16 %v812, %v808
        %v887 = vpack.c.bf16 %v814, %v810
        %v888 = vpack.c.bf16 %v822, %v818
        %v889 = vpack.c.bf16 %v824, %v820
        %v890 = vpack.c.bf16 %v832, %v828
        %v891 = vpack.c.bf16 %v834, %v830
        %v892 = vpack.c.bf16 %v842, %v838
        %v893 = vpack.c.bf16 %v844, %v840
        %v894 = vpack.c.bf16 %v852, %v848
        %v895 = vpack.c.bf16 %v854, %v850
        %v896 = vpack.c.bf16 %v862, %v858
        %v897 = vpack.c.bf16 %v864, %v860
        %v898 = vpack.c.bf16 %v872, %v868
        %v899 = vpack.c.bf16 %v874, %v870
        %v900 = vpack.c.bf16 %v882, %v878
        %v901 = vpack.c.bf16 %v884, %v880
        %v918 = vunpack.c.l.b16 %v886
        %v919 = vunpack.c.l.b16 %v887
        %v920 = vunpack.c.h.b16 %v886
        %v921 = vunpack.c.h.b16 %v887
        %v922 = vunpack.c.l.b16 %v888
        %v923 = vunpack.c.l.b16 %v889
        %v924 = vunpack.c.h.b16 %v888
        %v925 = vunpack.c.h.b16 %v889
        %v926 = vunpack.c.l.b16 %v890
        %v927 = vunpack.c.l.b16 %v891
        %v928 = vunpack.c.h.b16 %v890
        %v929 = vunpack.c.h.b16 %v891
        %v930 = vunpack.c.l.b16 %v892
        %v931 = vunpack.c.l.b16 %v893
        %v932 = vunpack.c.h.b16 %v892
        %v933 = vunpack.c.h.b16 %v893
        %v934 = vunpack.c.l.b16 %v894
        %v935 = vunpack.c.l.b16 %v895
        %v936 = vunpack.c.h.b16 %v894
        %v937 = vunpack.c.h.b16 %v895
        %v938 = vunpack.c.l.b16 %v896
        %v939 = vunpack.c.l.b16 %v897
        %v940 = vunpack.c.h.b16 %v896
        %v941 = vunpack.c.h.b16 %v897
        %v942 = vunpack.c.l.b16 %v898
        %v943 = vunpack.c.l.b16 %v899
        %v944 = vunpack.c.h.b16 %v898
        %v945 = vunpack.c.h.b16 %v899
        %v946 = vunpack.c.l.b16 %v900
        %v947 = vunpack.c.l.b16 %v901
        %v948 = vunpack.c.h.b16 %v900
        %v949 = vunpack.c.h.b16 %v901
        %v950 = vpack.c.b16 %v919, %v918
        %v951 = vpack.c.b16 %v921, %v920
        %v952 = vpack.c.b16 %v923, %v922
        %v953 = vpack.c.b16 %v925, %v924
        %v954 = vpack.c.b16 %v927, %v926
        %v955 = vpack.c.b16 %v929, %v928
        %v956 = vpack.c.b16 %v931, %v930
        %v957 = vpack.c.b16 %v933, %v932
        %v958 = vpack.c.b16 %v935, %v934
        %v959 = vpack.c.b16 %v937, %v936
        %v960 = vpack.c.b16 %v939, %v938
        %v961 = vpack.c.b16 %v941, %v940
        %v962 = vpack.c.b16 %v943, %v942
        %v963 = vpack.c.b16 %v945, %v944
        %v964 = vpack.c.b16 %v947, %v946
        %v965 = vpack.c.b16 %v949, %v948
        %v982 = vmax.bf16 %v950, %v954
        %v983 = vmax.bf16 %v951, %v955
        %v984 = vmax.bf16 %v952, %v956
        %v985 = vmax.bf16 %v953, %v957
        %v986 = vmax.bf16 %v982, %v958
        %v987 = vmax.bf16 %v983, %v959
        %v988 = vmax.bf16 %v984, %v960
        %v989 = vmax.bf16 %v985, %v961
        %v990 = vmax.bf16 %v986, %v962
        %v991 = vmax.bf16 %v987, %v963
        %v992 = vmax.bf16 %v988, %v964
        %v993 = vmax.bf16 %v989, %v965
        %v994 = vmax.bf16 %v990, %v991
        %v995 = vmax.bf16 %v992, %v993
        %v996 = vmax.bf16 %v994, %v995
        %v997 = vld [vmem:[#allocation6] sm:$0xff]
        %v998 = vld [vmem:[#allocation6 + $0x8] sm:$0xff]
        %v999 = vld [vmem:[#allocation6 + $0x10] sm:$0xff]
        %v1000 = vld [vmem:[#allocation6 + $0x18] sm:$0xff]
        %v1001 = vld [vmem:[#allocation6 + $0x20] sm:$0xff]
        %v1002 = vld [vmem:[#allocation6 + $0x28] sm:$0xff]
        %v1003 = vld [vmem:[#allocation6 + $0x30] sm:$0xff]
        %v1004 = vld [vmem:[#allocation6 + $0x38] sm:$0xff]
        %v1005 = vld [vmem:[#allocation6 + $0x40] sm:$0xff]
        %v1006 = vld [vmem:[#allocation6 + $0x48] sm:$0xff]
        %v1007 = vld [vmem:[#allocation6 + $0x50] sm:$0xff]
        %v1008 = vld [vmem:[#allocation6 + $0x58] sm:$0xff]
        %v1009 = vld [vmem:[#allocation6 + $0x60] sm:$0xff]
        %v1010 = vld [vmem:[#allocation6 + $0x68] sm:$0xff]
        %v1011 = vld [vmem:[#allocation6 + $0x70] sm:$0xff]
        %v1012 = vld [vmem:[#allocation6 + $0x78] sm:$0xff]
        %v1013 = vld [vmem:[#allocation6 + $0x80] sm:$0xff]
        %v1014 = vld [vmem:[#allocation6 + $0x88] sm:$0xff]
        %v1015 = vld [vmem:[#allocation6 + $0x90] sm:$0xff]
        %v1016 = vld [vmem:[#allocation6 + $0x98] sm:$0xff]
        %v1017 = vld [vmem:[#allocation6 + $0xa0] sm:$0xff]
        %v1018 = vld [vmem:[#allocation6 + $0xa8] sm:$0xff]
        %v1019 = vld [vmem:[#allocation6 + $0xb0] sm:$0xff]
        %v1020 = vld [vmem:[#allocation6 + $0xb8] sm:$0xff]
        %v1021 = vld [vmem:[#allocation6 + $0xc0] sm:$0xff]
        %v1022 = vld [vmem:[#allocation6 + $0xc8] sm:$0xff]
        %v1023 = vld [vmem:[#allocation6 + $0xd0] sm:$0xff]
        %v1024 = vld [vmem:[#allocation6 + $0xd8] sm:$0xff]
        %v1025 = vld [vmem:[#allocation6 + $0xe0] sm:$0xff]
        %v1026 = vld [vmem:[#allocation6 + $0xe8] sm:$0xff]
        %v1027 = vld [vmem:[#allocation6 + $0xf0] sm:$0xff]
        %v1028 = vld [vmem:[#allocation6 + $0xf8] sm:$0xff]
        %v1029 = vld [vmem:[#allocation6 + $0x100] sm:$0xff]
        %v1030 = vld [vmem:[#allocation6 + $0x108] sm:$0xff]
        %v1031 = vld [vmem:[#allocation6 + $0x110] sm:$0xff]
        %v1032 = vld [vmem:[#allocation6 + $0x118] sm:$0xff]
        %v1033 = vld [vmem:[#allocation6 + $0x120] sm:$0xff]
        %v1034 = vld [vmem:[#allocation6 + $0x128] sm:$0xff]
        %v1035 = vld [vmem:[#allocation6 + $0x130] sm:$0xff]
        %v1036 = vld [vmem:[#allocation6 + $0x138] sm:$0xff]
        %v1037 = vld [vmem:[#allocation6 + $0x140] sm:$0xff]
        %v1038 = vld [vmem:[#allocation6 + $0x148] sm:$0xff]
        %v1039 = vld [vmem:[#allocation6 + $0x150] sm:$0xff]
        %v1040 = vld [vmem:[#allocation6 + $0x158] sm:$0xff]
        %v1041 = vld [vmem:[#allocation6 + $0x160] sm:$0xff]
        %v1042 = vld [vmem:[#allocation6 + $0x168] sm:$0xff]
        %v1043 = vld [vmem:[#allocation6 + $0x170] sm:$0xff]
        %v1044 = vld [vmem:[#allocation6 + $0x178] sm:$0xff]
        %v1045 = vld [vmem:[#allocation6 + $0x180] sm:$0xff]
        %v1046 = vld [vmem:[#allocation6 + $0x188] sm:$0xff]
        %v1047 = vld [vmem:[#allocation6 + $0x190] sm:$0xff]
        %v1048 = vld [vmem:[#allocation6 + $0x198] sm:$0xff]
        %v1049 = vld [vmem:[#allocation6 + $0x1a0] sm:$0xff]
        %v1050 = vld [vmem:[#allocation6 + $0x1a8] sm:$0xff]
        %v1051 = vld [vmem:[#allocation6 + $0x1b0] sm:$0xff]
        %v1052 = vld [vmem:[#allocation6 + $0x1b8] sm:$0xff]
        %v1053 = vld [vmem:[#allocation6 + $0x1c0] sm:$0xff]
        %v1054 = vld [vmem:[#allocation6 + $0x1c8] sm:$0xff]
        %v1055 = vld [vmem:[#allocation6 + $0x1d0] sm:$0xff]
        %v1056 = vld [vmem:[#allocation6 + $0x1d8] sm:$0xff]
        %v1057 = vld [vmem:[#allocation6 + $0x1e0] sm:$0xff]
        %v1058 = vld [vmem:[#allocation6 + $0x1e8] sm:$0xff]
        %v1059 = vld [vmem:[#allocation6 + $0x1f0] sm:$0xff]
        %v1060 = vld [vmem:[#allocation6 + $0x1f8] sm:$0xff]
        %v1125 = vunpack.c.l.b16 %v997
        %v1126 = vunpack.c.h.b16 %v997
        %v1127 = vunpack.c.l.b16 %v998
        %v1128 = vunpack.c.h.b16 %v998
        %v1129 = vunpack.c.l.b16 %v999
        %v1130 = vunpack.c.h.b16 %v999
        %v1131 = vunpack.c.l.b16 %v1000
        %v1132 = vunpack.c.h.b16 %v1000
        %v1133 = vunpack.c.l.b16 %v1001
        %v1134 = vunpack.c.h.b16 %v1001
        %v1135 = vunpack.c.l.b16 %v1002
        %v1136 = vunpack.c.h.b16 %v1002
        %v1137 = vunpack.c.l.b16 %v1003
        %v1138 = vunpack.c.h.b16 %v1003
        %v1139 = vunpack.c.l.b16 %v1004
        %v1140 = vunpack.c.h.b16 %v1004
        %v1141 = vunpack.c.l.b16 %v1005
        %v1142 = vunpack.c.h.b16 %v1005
        %v1143 = vunpack.c.l.b16 %v1006
        %v1144 = vunpack.c.h.b16 %v1006
        %v1145 = vunpack.c.l.b16 %v1007
        %v1146 = vunpack.c.h.b16 %v1007
        %v1147 = vunpack.c.l.b16 %v1008
        %v1148 = vunpack.c.h.b16 %v1008
        %v1149 = vunpack.c.l.b16 %v1009
        %v1150 = vunpack.c.h.b16 %v1009
        %v1151 = vunpack.c.l.b16 %v1010
        %v1152 = vunpack.c.h.b16 %v1010
        %v1153 = vunpack.c.l.b16 %v1011
        %v1154 = vunpack.c.h.b16 %v1011
        %v1155 = vunpack.c.l.b16 %v1012
        %v1156 = vunpack.c.h.b16 %v1012
        %v1157 = vunpack.c.l.b16 %v1013
        %v1158 = vunpack.c.h.b16 %v1013
        %v1159 = vunpack.c.l.b16 %v1014
        %v1160 = vunpack.c.h.b16 %v1014
        %v1161 = vunpack.c.l.b16 %v1015
        %v1162 = vunpack.c.h.b16 %v1015
        %v1163 = vunpack.c.l.b16 %v1016
        %v1164 = vunpack.c.h.b16 %v1016
        %v1165 = vunpack.c.l.b16 %v1017
        %v1166 = vunpack.c.h.b16 %v1017
        %v1167 = vunpack.c.l.b16 %v1018
        %v1168 = vunpack.c.h.b16 %v1018
        %v1169 = vunpack.c.l.b16 %v1019
        %v1170 = vunpack.c.h.b16 %v1019
        %v1171 = vunpack.c.l.b16 %v1020
        %v1172 = vunpack.c.h.b16 %v1020
        %v1173 = vunpack.c.l.b16 %v1021
        %v1174 = vunpack.c.h.b16 %v1021
        %v1175 = vunpack.c.l.b16 %v1022
        %v1176 = vunpack.c.h.b16 %v1022
        %v1177 = vunpack.c.l.b16 %v1023
        %v1178 = vunpack.c.h.b16 %v1023
        %v1179 = vunpack.c.l.b16 %v1024
        %v1180 = vunpack.c.h.b16 %v1024
        %v1181 = vunpack.c.l.b16 %v1025
        %v1182 = vunpack.c.h.b16 %v1025
        %v1183 = vunpack.c.l.b16 %v1026
        %v1184 = vunpack.c.h.b16 %v1026
        %v1185 = vunpack.c.l.b16 %v1027
        %v1186 = vunpack.c.h.b16 %v1027
        %v1187 = vunpack.c.l.b16 %v1028
        %v1188 = vunpack.c.h.b16 %v1028
        %v1189 = vunpack.c.l.b16 %v1029
        %v1190 = vunpack.c.h.b16 %v1029
        %v1191 = vunpack.c.l.b16 %v1030
        %v1192 = vunpack.c.h.b16 %v1030
        %v1193 = vunpack.c.l.b16 %v1031
        %v1194 = vunpack.c.h.b16 %v1031
        %v1195 = vunpack.c.l.b16 %v1032
        %v1196 = vunpack.c.h.b16 %v1032
        %v1197 = vunpack.c.l.b16 %v1033
        %v1198 = vunpack.c.h.b16 %v1033
        %v1199 = vunpack.c.l.b16 %v1034
        %v1200 = vunpack.c.h.b16 %v1034
        %v1201 = vunpack.c.l.b16 %v1035
        %v1202 = vunpack.c.h.b16 %v1035
        %v1203 = vunpack.c.l.b16 %v1036
        %v1204 = vunpack.c.h.b16 %v1036
        %v1205 = vunpack.c.l.b16 %v1037
        %v1206 = vunpack.c.h.b16 %v1037
        %v1207 = vunpack.c.l.b16 %v1038
        %v1208 = vunpack.c.h.b16 %v1038
        %v1209 = vunpack.c.l.b16 %v1039
        %v1210 = vunpack.c.h.b16 %v1039
        %v1211 = vunpack.c.l.b16 %v1040
        %v1212 = vunpack.c.h.b16 %v1040
        %v1213 = vunpack.c.l.b16 %v1041
        %v1214 = vunpack.c.h.b16 %v1041
        %v1215 = vunpack.c.l.b16 %v1042
        %v1216 = vunpack.c.h.b16 %v1042
        %v1217 = vunpack.c.l.b16 %v1043
        %v1218 = vunpack.c.h.b16 %v1043
        %v1219 = vunpack.c.l.b16 %v1044
        %v1220 = vunpack.c.h.b16 %v1044
        %v1221 = vunpack.c.l.b16 %v1045
        %v1222 = vunpack.c.h.b16 %v1045
        %v1223 = vunpack.c.l.b16 %v1046
        %v1224 = vunpack.c.h.b16 %v1046
        %v1225 = vunpack.c.l.b16 %v1047
        %v1226 = vunpack.c.h.b16 %v1047
        %v1227 = vunpack.c.l.b16 %v1048
        %v1228 = vunpack.c.h.b16 %v1048
        %v1229 = vunpack.c.l.b16 %v1049
        %v1230 = vunpack.c.h.b16 %v1049
        %v1231 = vunpack.c.l.b16 %v1050
        %v1232 = vunpack.c.h.b16 %v1050
        %v1233 = vunpack.c.l.b16 %v1051
        %v1234 = vunpack.c.h.b16 %v1051
        %v1235 = vunpack.c.l.b16 %v1052
        %v1236 = vunpack.c.h.b16 %v1052
        %v1237 = vunpack.c.l.b16 %v1053
        %v1238 = vunpack.c.h.b16 %v1053
        %v1239 = vunpack.c.l.b16 %v1054
        %v1240 = vunpack.c.h.b16 %v1054
        %v1241 = vunpack.c.l.b16 %v1055
        %v1242 = vunpack.c.h.b16 %v1055
        %v1243 = vunpack.c.l.b16 %v1056
        %v1244 = vunpack.c.h.b16 %v1056
        %v1245 = vunpack.c.l.b16 %v1057
        %v1246 = vunpack.c.h.b16 %v1057
        %v1247 = vunpack.c.l.b16 %v1058
        %v1248 = vunpack.c.h.b16 %v1058
        %v1249 = vunpack.c.l.b16 %v1059
        %v1250 = vunpack.c.h.b16 %v1059
        %v1251 = vunpack.c.l.b16 %v1060
        %v1252 = vunpack.c.h.b16 %v1060
        %v1253 = vpack.c.b16 %v1129, %v1125
        %v1254 = vpack.c.b16 %v1130, %v1126
        %v1255 = vpack.c.b16 %v1131, %v1127
        %v1256 = vpack.c.b16 %v1132, %v1128
        %v1257 = vpack.c.b16 %v1137, %v1133
        %v1258 = vpack.c.b16 %v1138, %v1134
        %v1259 = vpack.c.b16 %v1139, %v1135
        %v1260 = vpack.c.b16 %v1140, %v1136
        %v1261 = vpack.c.b16 %v1145, %v1141
        %v1262 = vpack.c.b16 %v1146, %v1142
        %v1263 = vpack.c.b16 %v1147, %v1143
        %v1264 = vpack.c.b16 %v1148, %v1144
        %v1265 = vpack.c.b16 %v1153, %v1149
        %v1266 = vpack.c.b16 %v1154, %v1150
        %v1267 = vpack.c.b16 %v1155, %v1151
        %v1268 = vpack.c.b16 %v1156, %v1152
        %v1269 = vpack.c.b16 %v1161, %v1157
        %v1270 = vpack.c.b16 %v1162, %v1158
        %v1271 = vpack.c.b16 %v1163, %v1159
        %v1272 = vpack.c.b16 %v1164, %v1160
        %v1273 = vpack.c.b16 %v1169, %v1165
        %v1274 = vpack.c.b16 %v1170, %v1166
        %v1275 = vpack.c.b16 %v1171, %v1167
        %v1276 = vpack.c.b16 %v1172, %v1168
        %v1277 = vpack.c.b16 %v1177, %v1173
        %v1278 = vpack.c.b16 %v1178, %v1174
        %v1279 = vpack.c.b16 %v1179, %v1175
        %v1280 = vpack.c.b16 %v1180, %v1176
        %v1281 = vpack.c.b16 %v1185, %v1181
        %v1282 = vpack.c.b16 %v1186, %v1182
        %v1283 = vpack.c.b16 %v1187, %v1183
        %v1284 = vpack.c.b16 %v1188, %v1184
        %v1285 = vpack.c.b16 %v1193, %v1189
        %v1286 = vpack.c.b16 %v1194, %v1190
        %v1287 = vpack.c.b16 %v1195, %v1191
        %v1288 = vpack.c.b16 %v1196, %v1192
        %v1289 = vpack.c.b16 %v1201, %v1197
        %v1290 = vpack.c.b16 %v1202, %v1198
        %v1291 = vpack.c.b16 %v1203, %v1199
        %v1292 = vpack.c.b16 %v1204, %v1200
        %v1293 = vpack.c.b16 %v1209, %v1205
        %v1294 = vpack.c.b16 %v1210, %v1206
        %v1295 = vpack.c.b16 %v1211, %v1207
        %v1296 = vpack.c.b16 %v1212, %v1208
        %v1297 = vpack.c.b16 %v1217, %v1213
        %v1298 = vpack.c.b16 %v1218, %v1214
        %v1299 = vpack.c.b16 %v1219, %v1215
        %v1300 = vpack.c.b16 %v1220, %v1216
        %v1301 = vpack.c.b16 %v1225, %v1221
        %v1302 = vpack.c.b16 %v1226, %v1222
        %v1303 = vpack.c.b16 %v1227, %v1223
        %v1304 = vpack.c.b16 %v1228, %v1224
        %v1305 = vpack.c.b16 %v1233, %v1229
        %v1306 = vpack.c.b16 %v1234, %v1230
        %v1307 = vpack.c.b16 %v1235, %v1231
        %v1308 = vpack.c.b16 %v1236, %v1232
        %v1309 = vpack.c.b16 %v1241, %v1237
        %v1310 = vpack.c.b16 %v1242, %v1238
        %v1311 = vpack.c.b16 %v1243, %v1239
        %v1312 = vpack.c.b16 %v1244, %v1240
        %v1313 = vpack.c.b16 %v1249, %v1245
        %v1314 = vpack.c.b16 %v1250, %v1246
        %v1315 = vpack.c.b16 %v1251, %v1247
        %v1316 = vpack.c.b16 %v1252, %v1248
        %1381 = vmatprep.subr.bf16.mxu0 %v1254
        %1382 = vmatpush1.bf16.msra.mxu0 %v1253
        %1383 = vmatprep.subr.bf16.mxu0 %v1258
        %1384 = vmatpush1.bf16.msra.mxu0 %v1257
        %1385 = vmatprep.subr.bf16.mxu0 %v1262
        %1386 = vmatpush1.bf16.msra.mxu0 %v1261
        %1387 = vmatprep.subr.bf16.mxu0 %v1266
        %1388 = vmatpush1.bf16.msra.mxu0 %v1265
        %1389 = vmatprep.subr.bf16.mxu0 %v1270
        %1390 = vmatpush1.bf16.msra.mxu0 %v1269
        %1391 = vmatprep.subr.bf16.mxu0 %v1274
        %1392 = vmatpush1.bf16.msra.mxu0 %v1273
        %1393 = vmatprep.subr.bf16.mxu0 %v1278
        %1394 = vmatpush1.bf16.msra.mxu0 %v1277
        %1395 = vmatprep.subr.bf16.mxu0 %v1282
        %1396 = vmatpush1.bf16.msra.mxu0 %v1281
        %1397 = vmatprep.subr.bf16.mxu0 %v1286
        %1398 = vmatpush1.bf16.msra.mxu0 %v1285
        %1399 = vmatprep.subr.bf16.mxu0 %v1290
        %1400 = vmatpush1.bf16.msra.mxu0 %v1289
        %1401 = vmatprep.subr.bf16.mxu0 %v1294
        %1402 = vmatpush1.bf16.msra.mxu0 %v1293
        %1403 = vmatprep.subr.bf16.mxu0 %v1298
        %1404 = vmatpush1.bf16.msra.mxu0 %v1297
        %1405 = vmatprep.subr.bf16.mxu0 %v1302
        %1406 = vmatpush1.bf16.msra.mxu0 %v1301
        %1407 = vmatprep.subr.bf16.mxu0 %v1306
        %1408 = vmatpush1.bf16.msra.mxu0 %v1305
        %1409 = vmatprep.subr.bf16.mxu0 %v1310
        %1410 = vmatpush1.bf16.msra.mxu0 %v1309
        %1411 = vmatprep.subr.bf16.mxu0 %v1314
        %1412 = vmatpush1.bf16.msra.mxu0 %v1313
        %1413 = vmatprep.mubr.bf16.mxu0 %v887
        %1414 = vmatmul.mubr.bf16.gmra.mrb[0].mxu0 %v886
        %v1415 = vpop.f32.mrb[0].mxu0
        %v1416 = vadd.f32 0.0, %v1415
        %v1417 = vpop.f32.mrb[0].mxu0
        %v1418 = vadd.f32 0.0, %v1417
        %v1419 = vpop.f32.mrb[0].mxu0
        %v1420 = vadd.f32 0.0, %v1419
        %v1421 = vpop.f32.mrb[0].mxu0
        %v1422 = vadd.f32 0.0, %v1421
        %1423 = vmatprep.mubr.bf16.mxu0 %v889
        %1424 = vmatmul.mubr.bf16.gmra.mrb[0].mxu0 %v888
        %v1425 = vpop.f32.mrb[0].mxu0
        %v1426 = vadd.f32 0.0, %v1425
        %v1427 = vpop.f32.mrb[0].mxu0
        %v1428 = vadd.f32 0.0, %v1427
        %v1429 = vpop.f32.mrb[0].mxu0
        %v1430 = vadd.f32 0.0, %v1429
        %v1431 = vpop.f32.mrb[0].mxu0
        %v1432 = vadd.f32 0.0, %v1431
        %1433 = vmatprep.mubr.bf16.mxu0 %v891
        %1434 = vmatmul.mubr.bf16.gmra.mrb[0].mxu0 %v890
        %v1435 = vpop.f32.mrb[0].mxu0
        %v1436 = vadd.f32 0.0, %v1435
        %v1437 = vpop.f32.mrb[0].mxu0
        %v1438 = vadd.f32 0.0, %v1437
        %v1439 = vpop.f32.mrb[0].mxu0
        %v1440 = vadd.f32 0.0, %v1439
        %v1441 = vpop.f32.mrb[0].mxu0
        %v1442 = vadd.f32 0.0, %v1441
        %1443 = vmatprep.mubr.bf16.mxu0 %v893
        %1444 = vmatmul.mubr.bf16.gmra.mrb[0].mxu0 %v892
        %v1445 = vpop.f32.mrb[0].mxu0
        %v1446 = vadd.f32 0.0, %v1445
        %v1447 = vpop.f32.mrb[0].mxu0
        %v1448 = vadd.f32 0.0, %v1447
        %v1449 = vpop.f32.mrb[0].mxu0
        %v1450 = vadd.f32 0.0, %v1449
        %v1451 = vpop.f32.mrb[0].mxu0
        %v1452 = vadd.f32 0.0, %v1451
        %1453 = vmatprep.mubr.bf16.mxu0 %v895
        %1454 = vmatmul.mubr.bf16.gmra.mrb[0].mxu0 %v894
        %v1455 = vpop.f32.mrb[0].mxu0
        %v1456 = vadd.f32 0.0, %v1455
        %v1457 = vpop.f32.mrb[0].mxu0
        %v1458 = vadd.f32 0.0, %v1457
        %v1459 = vpop.f32.mrb[0].mxu0
        %v1460 = vadd.f32 0.0, %v1459
        %v1461 = vpop.f32.mrb[0].mxu0
        %v1462 = vadd.f32 0.0, %v1461
        %1463 = vmatprep.mubr.bf16.mxu0 %v897
        %1464 = vmatmul.mubr.bf16.gmra.mrb[0].mxu0 %v896
        %v1465 = vpop.f32.mrb[0].mxu0
        %v1466 = vadd.f32 0.0, %v1465
        %v1467 = vpop.f32.mrb[0].mxu0
        %v1468 = vadd.f32 0.0, %v1467
        %v1469 = vpop.f32.mrb[0].mxu0
        %v1470 = vadd.f32 0.0, %v1469
        %v1471 = vpop.f32.mrb[0].mxu0
        %v1472 = vadd.f32 0.0, %v1471
        %1473 = vmatprep.mubr.bf16.mxu0 %v899
        %1474 = vmatmul.mubr.bf16.gmra.mrb[0].mxu0 %v898
        %v1475 = vpop.f32.mrb[0].mxu0
        %v1476 = vadd.f32 0.0, %v1475
        %v1477 = vpop.f32.mrb[0].mxu0
        %v1478 = vadd.f32 0.0, %v1477
        %v1479 = vpop.f32.mrb[0].mxu0
        %v1480 = vadd.f32 0.0, %v1479
        %v1481 = vpop.f32.mrb[0].mxu0
        %v1482 = vadd.f32 0.0, %v1481
        %1483 = vmatprep.mubr.bf16.mxu0 %v901
        %1484 = vmatmul.mubr.bf16.gmra.mrb[0].mxu0 %v900
        %v1485 = vpop.f32.mrb[0].mxu0
        %v1486 = vadd.f32 0.0, %v1485
        %v1487 = vpop.f32.mrb[0].mxu0
        %v1488 = vadd.f32 0.0, %v1487
        %v1489 = vpop.f32.mrb[0].mxu0
        %v1490 = vadd.f32 0.0, %v1489
        %v1491 = vpop.f32.mrb[0].mxu0
        %v1492 = vadd.f32 0.0, %v1491
        %1493 = vdwg.mxu0
        %1494 = vmatprep.subr.bf16.mxu0 %v1256
        %1495 = vmatpush1.bf16.msra.mxu0 %v1255
        %1496 = vmatprep.subr.bf16.mxu0 %v1260
        %1497 = vmatpush1.bf16.msra.mxu0 %v1259
        %1498 = vmatprep.subr.bf16.mxu0 %v1264
        %1499 = vmatpush1.bf16.msra.mxu0 %v1263
        %1500 = vmatprep.subr.bf16.mxu0 %v1268
        %1501 = vmatpush1.bf16.msra.mxu0 %v1267
        %1502 = vmatprep.subr.bf16.mxu0 %v1272
        %1503 = vmatpush1.bf16.msra.mxu0 %v1271
        %1504 = vmatprep.subr.bf16.mxu0 %v1276
        %1505 = vmatpush1.bf16.msra.mxu0 %v1275
        %1506 = vmatprep.subr.bf16.mxu0 %v1280
        %1507 = vmatpush1.bf16.msra.mxu0 %v1279
        %1508 = vmatprep.subr.bf16.mxu0 %v1284
        %1509 = vmatpush1.bf16.msra.mxu0 %v1283
        %1510 = vmatprep.subr.bf16.mxu0 %v1288
        %1511 = vmatpush1.bf16.msra.mxu0 %v1287
        %1512 = vmatprep.subr.bf16.mxu0 %v1292
        %1513 = vmatpush1.bf16.msra.mxu0 %v1291
        %1514 = vmatprep.subr.bf16.mxu0 %v1296
        %1515 = vmatpush1.bf16.msra.mxu0 %v1295
        %1516 = vmatprep.subr.bf16.mxu0 %v1300
        %1517 = vmatpush1.bf16.msra.mxu0 %v1299
        %1518 = vmatprep.subr.bf16.mxu0 %v1304
        %1519 = vmatpush1.bf16.msra.mxu0 %v1303
        %1520 = vmatprep.subr.bf16.mxu0 %v1308
        %1521 = vmatpush1.bf16.msra.mxu0 %v1307
        %1522 = vmatprep.subr.bf16.mxu0 %v1312
        %1523 = vmatpush1.bf16.msra.mxu0 %v1311
        %1524 = vmatprep.subr.bf16.mxu0 %v1316
        %1525 = vmatpush1.bf16.msra.mxu0 %v1315
        %1526 = vmatprep.mubr.bf16.mxu0 %v887
        %1527 = vmatmul.mubr.bf16.gmra.mrb[0].mxu0 %v886
        %v1528 = vpop.f32.mrb[0].mxu0
        %v1529 = vadd.f32 0.0, %v1528
        %v1530 = vpop.f32.mrb[0].mxu0
        %v1531 = vadd.f32 0.0, %v1530
        %v1532 = vpop.f32.mrb[0].mxu0
        %v1533 = vadd.f32 0.0, %v1532
        %v1534 = vpop.f32.mrb[0].mxu0
        %v1535 = vadd.f32 0.0, %v1534
        %1536 = vmatprep.mubr.bf16.mxu0 %v889
        %1537 = vmatmul.mubr.bf16.gmra.mrb[0].mxu0 %v888
        %v1538 = vpop.f32.mrb[0].mxu0
        %v1539 = vadd.f32 0.0, %v1538
        %v1540 = vpop.f32.mrb[0].mxu0
        %v1541 = vadd.f32 0.0, %v1540
        %v1542 = vpop.f32.mrb[0].mxu0
        %v1543 = vadd.f32 0.0, %v1542
        %v1544 = vpop.f32.mrb[0].mxu0
        %v1545 = vadd.f32 0.0, %v1544
        %1546 = vmatprep.mubr.bf16.mxu0 %v891
        %1547 = vmatmul.mubr.bf16.gmra.mrb[0].mxu0 %v890
        %v1548 = vpop.f32.mrb[0].mxu0
        %v1549 = vadd.f32 0.0, %v1548
        %v1550 = vpop.f32.mrb[0].mxu0
        %v1551 = vadd.f32 0.0, %v1550
        %v1552 = vpop.f32.mrb[0].mxu0
        %v1553 = vadd.f32 0.0, %v1552
        %v1554 = vpop.f32.mrb[0].mxu0
        %v1555 = vadd.f32 0.0, %v1554
        %1556 = vmatprep.mubr.bf16.mxu0 %v893
        %1557 = vmatmul.mubr.bf16.gmra.mrb[0].mxu0 %v892
        %v1558 = vpop.f32.mrb[0].mxu0
        %v1559 = vadd.f32 0.0, %v1558
        %v1560 = vpop.f32.mrb[0].mxu0
        %v1561 = vadd.f32 0.0, %v1560
        %v1562 = vpop.f32.mrb[0].mxu0
        %v1563 = vadd.f32 0.0, %v1562
        %v1564 = vpop.f32.mrb[0].mxu0
        %v1565 = vadd.f32 0.0, %v1564
        %1566 = vmatprep.mubr.bf16.mxu0 %v895
        %1567 = vmatmul.mubr.bf16.gmra.mrb[0].mxu0 %v894
        %v1568 = vpop.f32.mrb[0].mxu0
        %v1569 = vadd.f32 0.0, %v1568
        %v1570 = vpop.f32.mrb[0].mxu0
        %v1571 = vadd.f32 0.0, %v1570
        %v1572 = vpop.f32.mrb[0].mxu0
        %v1573 = vadd.f32 0.0, %v1572
        %v1574 = vpop.f32.mrb[0].mxu0
        %v1575 = vadd.f32 0.0, %v1574
        %1576 = vmatprep.mubr.bf16.mxu0 %v897
        %1577 = vmatmul.mubr.bf16.gmra.mrb[0].mxu0 %v896
        %v1578 = vpop.f32.mrb[0].mxu0
        %v1579 = vadd.f32 0.0, %v1578
        %v1580 = vpop.f32.mrb[0].mxu0
        %v1581 = vadd.f32 0.0, %v1580
        %v1582 = vpop.f32.mrb[0].mxu0
        %v1583 = vadd.f32 0.0, %v1582
        %v1584 = vpop.f32.mrb[0].mxu0
        %v1585 = vadd.f32 0.0, %v1584
        %1586 = vmatprep.mubr.bf16.mxu0 %v899
        %1587 = vmatmul.mubr.bf16.gmra.mrb[0].mxu0 %v898
        %v1588 = vpop.f32.mrb[0].mxu0
        %v1589 = vadd.f32 0.0, %v1588
        %v1590 = vpop.f32.mrb[0].mxu0
        %v1591 = vadd.f32 0.0, %v1590
        %v1592 = vpop.f32.mrb[0].mxu0
        %v1593 = vadd.f32 0.0, %v1592
        %v1594 = vpop.f32.mrb[0].mxu0
        %v1595 = vadd.f32 0.0, %v1594
        %1596 = vmatprep.mubr.bf16.mxu0 %v901
        %1597 = vmatmul.mubr.bf16.gmra.mrb[0].mxu0 %v900
        %v1598 = vpop.f32.mrb[0].mxu0
        %v1599 = vadd.f32 0.0, %v1598
        %v1600 = vpop.f32.mrb[0].mxu0
        %v1601 = vadd.f32 0.0, %v1600
        %v1602 = vpop.f32.mrb[0].mxu0
        %v1603 = vadd.f32 0.0, %v1602
        %v1604 = vpop.f32.mrb[0].mxu0
        %v1605 = vadd.f32 0.0, %v1604
        %1606 = vdwg.mxu0
        %v1607 = vld [vmem:[#allocation3] sm:$0xff]
        %v1608 = vld [vmem:[#allocation3 + $0x8] sm:$0xff]
        %v1609 = vld [vmem:[#allocation3 + $0x10] sm:$0xff]
        %v1610 = vld [vmem:[#allocation3 + $0x18] sm:$0xff]
        %v1611 = vld [vmem:[#allocation3 + $0x20] sm:$0xff]
        %v1612 = vld [vmem:[#allocation3 + $0x28] sm:$0xff]
        %v1613 = vld [vmem:[#allocation3 + $0x30] sm:$0xff]
        %v1614 = vld [vmem:[#allocation3 + $0x38] sm:$0xff]
        %v1615 = vld [vmem:[#allocation3 + $0x40] sm:$0xff]
        %v1616 = vld [vmem:[#allocation3 + $0x48] sm:$0xff]
        %v1617 = vld [vmem:[#allocation3 + $0x50] sm:$0xff]
        %v1618 = vld [vmem:[#allocation3 + $0x58] sm:$0xff]
        %v1619 = vld [vmem:[#allocation3 + $0x60] sm:$0xff]
        %v1620 = vld [vmem:[#allocation3 + $0x68] sm:$0xff]
        %v1621 = vld [vmem:[#allocation3 + $0x70] sm:$0xff]
        %v1622 = vld [vmem:[#allocation3 + $0x78] sm:$0xff]
        %v1623 = vld [vmem:[#allocation3 + $0x80] sm:$0xff]
        %v1624 = vld [vmem:[#allocation3 + $0x88] sm:$0xff]
        %v1625 = vld [vmem:[#allocation3 + $0x90] sm:$0xff]
        %v1626 = vld [vmem:[#allocation3 + $0x98] sm:$0xff]
        %v1627 = vld [vmem:[#allocation3 + $0xa0] sm:$0xff]
        %v1628 = vld [vmem:[#allocation3 + $0xa8] sm:$0xff]
        %v1629 = vld [vmem:[#allocation3 + $0xb0] sm:$0xff]
        %v1630 = vld [vmem:[#allocation3 + $0xb8] sm:$0xff]
        %v1631 = vld [vmem:[#allocation3 + $0xc0] sm:$0xff]
        %v1632 = vld [vmem:[#allocation3 + $0xc8] sm:$0xff]
        %v1633 = vld [vmem:[#allocation3 + $0xd0] sm:$0xff]
        %v1634 = vld [vmem:[#allocation3 + $0xd8] sm:$0xff]
        %v1635 = vld [vmem:[#allocation3 + $0xe0] sm:$0xff]
        %v1636 = vld [vmem:[#allocation3 + $0xe8] sm:$0xff]
        %v1637 = vld [vmem:[#allocation3 + $0xf0] sm:$0xff]
        %v1638 = vld [vmem:[#allocation3 + $0xf8] sm:$0xff]
        %v1639 = vld [vmem:[#allocation3 + $0x100] sm:$0xff]
        %v1640 = vld [vmem:[#allocation3 + $0x108] sm:$0xff]
        %v1641 = vld [vmem:[#allocation3 + $0x110] sm:$0xff]
        %v1642 = vld [vmem:[#allocation3 + $0x118] sm:$0xff]
        %v1643 = vld [vmem:[#allocation3 + $0x120] sm:$0xff]
        %v1644 = vld [vmem:[#allocation3 + $0x128] sm:$0xff]
        %v1645 = vld [vmem:[#allocation3 + $0x130] sm:$0xff]
        %v1646 = vld [vmem:[#allocation3 + $0x138] sm:$0xff]
        %v1647 = vld [vmem:[#allocation3 + $0x140] sm:$0xff]
        %v1648 = vld [vmem:[#allocation3 + $0x148] sm:$0xff]
        %v1649 = vld [vmem:[#allocation3 + $0x150] sm:$0xff]
        %v1650 = vld [vmem:[#allocation3 + $0x158] sm:$0xff]
        %v1651 = vld [vmem:[#allocation3 + $0x160] sm:$0xff]
        %v1652 = vld [vmem:[#allocation3 + $0x168] sm:$0xff]
        %v1653 = vld [vmem:[#allocation3 + $0x170] sm:$0xff]
        %v1654 = vld [vmem:[#allocation3 + $0x178] sm:$0xff]
        %v1655 = vld [vmem:[#allocation3 + $0x180] sm:$0xff]
        %v1656 = vld [vmem:[#allocation3 + $0x188] sm:$0xff]
        %v1657 = vld [vmem:[#allocation3 + $0x190] sm:$0xff]
        %v1658 = vld [vmem:[#allocation3 + $0x198] sm:$0xff]
        %v1659 = vld [vmem:[#allocation3 + $0x1a0] sm:$0xff]
        %v1660 = vld [vmem:[#allocation3 + $0x1a8] sm:$0xff]
        %v1661 = vld [vmem:[#allocation3 + $0x1b0] sm:$0xff]
        %v1662 = vld [vmem:[#allocation3 + $0x1b8] sm:$0xff]
        %v1663 = vld [vmem:[#allocation3 + $0x1c0] sm:$0xff]
        %v1664 = vld [vmem:[#allocation3 + $0x1c8] sm:$0xff]
        %v1665 = vld [vmem:[#allocation3 + $0x1d0] sm:$0xff]
        %v1666 = vld [vmem:[#allocation3 + $0x1d8] sm:$0xff]
        %v1667 = vld [vmem:[#allocation3 + $0x1e0] sm:$0xff]
        %v1668 = vld [vmem:[#allocation3 + $0x1e8] sm:$0xff]
        %v1669 = vld [vmem:[#allocation3 + $0x1f0] sm:$0xff]
        %v1670 = vld [vmem:[#allocation3 + $0x1f8] sm:$0xff]
        %v1672 = vunpack.c.l.b16 %v996
        %v1673 = vunpack.c.h.b16 %v996
        %v1674 = vpack.c.b16 %v1672, %v1672
        %v1675 = vpack.c.b16 %v1673, %v1673
        %v1742 = vunpack.c.l.b16 %v1607
        %v1743 = vunpack.c.h.b16 %v1607
        %v1744 = vunpack.c.l.b16 %v1608
        %v1745 = vunpack.c.h.b16 %v1608
        %v1746 = vunpack.c.l.b16 %v1609
        %v1747 = vunpack.c.h.b16 %v1609
        %v1748 = vunpack.c.l.b16 %v1610
        %v1749 = vunpack.c.h.b16 %v1610
        %v1750 = vunpack.c.l.b16 %v1611
        %v1751 = vunpack.c.h.b16 %v1611
        %v1752 = vunpack.c.l.b16 %v1612
        %v1753 = vunpack.c.h.b16 %v1612
        %v1754 = vunpack.c.l.b16 %v1613
        %v1755 = vunpack.c.h.b16 %v1613
        %v1756 = vunpack.c.l.b16 %v1614
        %v1757 = vunpack.c.h.b16 %v1614
        %v1758 = vunpack.c.l.b16 %v1615
        %v1759 = vunpack.c.h.b16 %v1615
        %v1760 = vunpack.c.l.b16 %v1616
        %v1761 = vunpack.c.h.b16 %v1616
        %v1762 = vunpack.c.l.b16 %v1617
        %v1763 = vunpack.c.h.b16 %v1617
        %v1764 = vunpack.c.l.b16 %v1618
        %v1765 = vunpack.c.h.b16 %v1618
        %v1766 = vunpack.c.l.b16 %v1619
        %v1767 = vunpack.c.h.b16 %v1619
        %v1768 = vunpack.c.l.b16 %v1620
        %v1769 = vunpack.c.h.b16 %v1620
        %v1770 = vunpack.c.l.b16 %v1621
        %v1771 = vunpack.c.h.b16 %v1621
        %v1772 = vunpack.c.l.b16 %v1622
        %v1773 = vunpack.c.h.b16 %v1622
        %v1774 = vunpack.c.l.b16 %v1623
        %v1775 = vunpack.c.h.b16 %v1623
        %v1776 = vunpack.c.l.b16 %v1624
        %v1777 = vunpack.c.h.b16 %v1624
        %v1778 = vunpack.c.l.b16 %v1625
        %v1779 = vunpack.c.h.b16 %v1625
        %v1780 = vunpack.c.l.b16 %v1626
        %v1781 = vunpack.c.h.b16 %v1626
        %v1782 = vunpack.c.l.b16 %v1627
        %v1783 = vunpack.c.h.b16 %v1627
        %v1784 = vunpack.c.l.b16 %v1628
        %v1785 = vunpack.c.h.b16 %v1628
        %v1786 = vunpack.c.l.b16 %v1629
        %v1787 = vunpack.c.h.b16 %v1629
        %v1788 = vunpack.c.l.b16 %v1630
        %v1789 = vunpack.c.h.b16 %v1630
        %v1790 = vunpack.c.l.b16 %v1631
        %v1791 = vunpack.c.h.b16 %v1631
        %v1792 = vunpack.c.l.b16 %v1632
        %v1793 = vunpack.c.h.b16 %v1632
        %v1794 = vunpack.c.l.b16 %v1633
        %v1795 = vunpack.c.h.b16 %v1633
        %v1796 = vunpack.c.l.b16 %v1634
        %v1797 = vunpack.c.h.b16 %v1634
        %v1798 = vunpack.c.l.b16 %v1635
        %v1799 = vunpack.c.h.b16 %v1635
        %v1800 = vunpack.c.l.b16 %v1636
        %v1801 = vunpack.c.h.b16 %v1636
        %v1802 = vunpack.c.l.b16 %v1637
        %v1803 = vunpack.c.h.b16 %v1637
        %v1804 = vunpack.c.l.b16 %v1638
        %v1805 = vunpack.c.h.b16 %v1638
        %v1806 = vunpack.c.l.b16 %v1639
        %v1807 = vunpack.c.h.b16 %v1639
        %v1808 = vunpack.c.l.b16 %v1640
        %v1809 = vunpack.c.h.b16 %v1640
        %v1810 = vunpack.c.l.b16 %v1641
        %v1811 = vunpack.c.h.b16 %v1641
        %v1812 = vunpack.c.l.b16 %v1642
        %v1813 = vunpack.c.h.b16 %v1642
        %v1814 = vunpack.c.l.b16 %v1643
        %v1815 = vunpack.c.h.b16 %v1643
        %v1816 = vunpack.c.l.b16 %v1644
        %v1817 = vunpack.c.h.b16 %v1644
        %v1818 = vunpack.c.l.b16 %v1645
        %v1819 = vunpack.c.h.b16 %v1645
        %v1820 = vunpack.c.l.b16 %v1646
        %v1821 = vunpack.c.h.b16 %v1646
        %v1822 = vunpack.c.l.b16 %v1647
        %v1823 = vunpack.c.h.b16 %v1647
        %v1824 = vunpack.c.l.b16 %v1648
        %v1825 = vunpack.c.h.b16 %v1648
        %v1826 = vunpack.c.l.b16 %v1649
        %v1827 = vunpack.c.h.b16 %v1649
        %v1828 = vunpack.c.l.b16 %v1650
        %v1829 = vunpack.c.h.b16 %v1650
        %v1830 = vunpack.c.l.b16 %v1651
        %v1831 = vunpack.c.h.b16 %v1651
        %v1832 = vunpack.c.l.b16 %v1652
        %v1833 = vunpack.c.h.b16 %v1652
        %v1834 = vunpack.c.l.b16 %v1653
        %v1835 = vunpack.c.h.b16 %v1653
        %v1836 = vunpack.c.l.b16 %v1654
        %v1837 = vunpack.c.h.b16 %v1654
        %v1838 = vunpack.c.l.b16 %v1655
        %v1839 = vunpack.c.h.b16 %v1655
        %v1840 = vunpack.c.l.b16 %v1656
        %v1841 = vunpack.c.h.b16 %v1656
        %v1842 = vunpack.c.l.b16 %v1657
        %v1843 = vunpack.c.h.b16 %v1657
        %v1844 = vunpack.c.l.b16 %v1658
        %v1845 = vunpack.c.h.b16 %v1658
        %v1846 = vunpack.c.l.b16 %v1659
        %v1847 = vunpack.c.h.b16 %v1659
        %v1848 = vunpack.c.l.b16 %v1660
        %v1849 = vunpack.c.h.b16 %v1660
        %v1850 = vunpack.c.l.b16 %v1661
        %v1851 = vunpack.c.h.b16 %v1661
        %v1852 = vunpack.c.l.b16 %v1662
        %v1853 = vunpack.c.h.b16 %v1662
        %v1854 = vunpack.c.l.b16 %v1663
        %v1855 = vunpack.c.h.b16 %v1663
        %v1856 = vunpack.c.l.b16 %v1664
        %v1857 = vunpack.c.h.b16 %v1664
        %v1858 = vunpack.c.l.b16 %v1665
        %v1859 = vunpack.c.h.b16 %v1665
        %v1860 = vunpack.c.l.b16 %v1666
        %v1861 = vunpack.c.h.b16 %v1666
        %v1862 = vunpack.c.l.b16 %v1667
        %v1863 = vunpack.c.h.b16 %v1667
        %v1864 = vunpack.c.l.b16 %v1668
        %v1865 = vunpack.c.h.b16 %v1668
        %v1866 = vunpack.c.l.b16 %v1669
        %v1867 = vunpack.c.h.b16 %v1669
        %v1868 = vunpack.c.l.b16 %v1670
        %v1869 = vunpack.c.h.b16 %v1670
        %v1870 = vpack.c.b16 %v1746, %v1742
        %v1871 = vpack.c.b16 %v1747, %v1743
        %v1872 = vpack.c.b16 %v1748, %v1744
        %v1873 = vpack.c.b16 %v1749, %v1745
        %v1874 = vpack.c.b16 %v1754, %v1750
        %v1875 = vpack.c.b16 %v1755, %v1751
        %v1876 = vpack.c.b16 %v1756, %v1752
        %v1877 = vpack.c.b16 %v1757, %v1753
        %v1878 = vpack.c.b16 %v1762, %v1758
        %v1879 = vpack.c.b16 %v1763, %v1759
        %v1880 = vpack.c.b16 %v1764, %v1760
        %v1881 = vpack.c.b16 %v1765, %v1761
        %v1882 = vpack.c.b16 %v1770, %v1766
        %v1883 = vpack.c.b16 %v1771, %v1767
        %v1884 = vpack.c.b16 %v1772, %v1768
        %v1885 = vpack.c.b16 %v1773, %v1769
        %v1886 = vpack.c.b16 %v1778, %v1774
        %v1887 = vpack.c.b16 %v1779, %v1775
        %v1888 = vpack.c.b16 %v1780, %v1776
        %v1889 = vpack.c.b16 %v1781, %v1777
        %v1890 = vpack.c.b16 %v1786, %v1782
        %v1891 = vpack.c.b16 %v1787, %v1783
        %v1892 = vpack.c.b16 %v1788, %v1784
        %v1893 = vpack.c.b16 %v1789, %v1785
        %v1894 = vpack.c.b16 %v1794, %v1790
        %v1895 = vpack.c.b16 %v1795, %v1791
        %v1896 = vpack.c.b16 %v1796, %v1792
        %v1897 = vpack.c.b16 %v1797, %v1793
        %v1898 = vpack.c.b16 %v1802, %v1798
        %v1899 = vpack.c.b16 %v1803, %v1799
        %v1900 = vpack.c.b16 %v1804, %v1800
        %v1901 = vpack.c.b16 %v1805, %v1801
        %v1902 = vpack.c.b16 %v1810, %v1806
        %v1903 = vpack.c.b16 %v1811, %v1807
        %v1904 = vpack.c.b16 %v1812, %v1808
        %v1905 = vpack.c.b16 %v1813, %v1809
        %v1906 = vpack.c.b16 %v1818, %v1814
        %v1907 = vpack.c.b16 %v1819, %v1815
        %v1908 = vpack.c.b16 %v1820, %v1816
        %v1909 = vpack.c.b16 %v1821, %v1817
        %v1910 = vpack.c.b16 %v1826, %v1822
        %v1911 = vpack.c.b16 %v1827, %v1823
        %v1912 = vpack.c.b16 %v1828, %v1824
        %v1913 = vpack.c.b16 %v1829, %v1825
        %v1914 = vpack.c.b16 %v1834, %v1830
        %v1915 = vpack.c.b16 %v1835, %v1831
        %v1916 = vpack.c.b16 %v1836, %v1832
        %v1917 = vpack.c.b16 %v1837, %v1833
        %v1918 = vpack.c.b16 %v1842, %v1838
        %v1919 = vpack.c.b16 %v1843, %v1839
        %v1920 = vpack.c.b16 %v1844, %v1840
        %v1921 = vpack.c.b16 %v1845, %v1841
        %v1922 = vpack.c.b16 %v1850, %v1846
        %v1923 = vpack.c.b16 %v1851, %v1847
        %v1924 = vpack.c.b16 %v1852, %v1848
        %v1925 = vpack.c.b16 %v1853, %v1849
        %v1926 = vpack.c.b16 %v1858, %v1854
        %v1927 = vpack.c.b16 %v1859, %v1855
        %v1928 = vpack.c.b16 %v1860, %v1856
        %v1929 = vpack.c.b16 %v1861, %v1857
        %v1930 = vpack.c.b16 %v1866, %v1862
        %v1931 = vpack.c.b16 %v1867, %v1863
        %v1932 = vpack.c.b16 %v1868, %v1864
        %v1933 = vpack.c.b16 %v1869, %v1865
        %1998 = vmatprep.subr.bf16.mxu0 %v1871
        %1999 = vmatpush1.bf16.msra.mxu0 %v1870
        %2000 = vmatprep.subr.bf16.mxu0 %v1875
        %2001 = vmatpush1.bf16.msra.mxu0 %v1874
        %2002 = vmatprep.subr.bf16.mxu0 %v1879
        %2003 = vmatpush1.bf16.msra.mxu0 %v1878
        %2004 = vmatprep.subr.bf16.mxu0 %v1883
        %2005 = vmatpush1.bf16.msra.mxu0 %v1882
        %2006 = vmatprep.subr.bf16.mxu0 %v1887
        %2007 = vmatpush1.bf16.msra.mxu0 %v1886
        %2008 = vmatprep.subr.bf16.mxu0 %v1891
        %2009 = vmatpush1.bf16.msra.mxu0 %v1890
        %2010 = vmatprep.subr.bf16.mxu0 %v1895
        %2011 = vmatpush1.bf16.msra.mxu0 %v1894
        %2012 = vmatprep.subr.bf16.mxu0 %v1899
        %2013 = vmatpush1.bf16.msra.mxu0 %v1898
        %2014 = vmatprep.subr.bf16.mxu0 %v1903
        %2015 = vmatpush1.bf16.msra.mxu0 %v1902
        %2016 = vmatprep.subr.bf16.mxu0 %v1907
        %2017 = vmatpush1.bf16.msra.mxu0 %v1906
        %2018 = vmatprep.subr.bf16.mxu0 %v1911
        %2019 = vmatpush1.bf16.msra.mxu0 %v1910
        %2020 = vmatprep.subr.bf16.mxu0 %v1915
        %2021 = vmatpush1.bf16.msra.mxu0 %v1914
        %2022 = vmatprep.subr.bf16.mxu0 %v1919
        %2023 = vmatpush1.bf16.msra.mxu0 %v1918
        %2024 = vmatprep.subr.bf16.mxu0 %v1923
        %2025 = vmatpush1.bf16.msra.mxu0 %v1922
        %2026 = vmatprep.subr.bf16.mxu0 %v1927
        %2027 = vmatpush1.bf16.msra.mxu0 %v1926
        %2028 = vmatprep.subr.bf16.mxu0 %v1931
        %2029 = vmatpush1.bf16.msra.mxu0 %v1930
        %2030 = vmatprep.mubr.bf16.mxu0 %v1675
        %2031 = vmatmul.mubr.bf16.gmra.mrb[0].mxu0 %v1674
        %v2032 = vpop.f32.mrb[0].mxu0
        %v2033 = vadd.f32 0.0, %v2032
        %v2034 = vpop.f32.mrb[0].mxu0
        %v2035 = vadd.f32 0.0, %v2034
        %v2036 = vpop.f32.mrb[0].mxu0
        %v2037 = vpop.f32.mrb[0].mxu0
        %2038 = vdwg.mxu0
        %2039 = vmatprep.subr.bf16.mxu0 %v1873
        %2040 = vmatpush1.bf16.msra.mxu0 %v1872
        %2041 = vmatprep.subr.bf16.mxu0 %v1877
        %2042 = vmatpush1.bf16.msra.mxu0 %v1876
        %2043 = vmatprep.subr.bf16.mxu0 %v1881
        %2044 = vmatpush1.bf16.msra.mxu0 %v1880
        %2045 = vmatprep.subr.bf16.mxu0 %v1885
        %2046 = vmatpush1.bf16.msra.mxu0 %v1884
        %2047 = vmatprep.subr.bf16.mxu0 %v1889
        %2048 = vmatpush1.bf16.msra.mxu0 %v1888
        %2049 = vmatprep.subr.bf16.mxu0 %v1893
        %2050 = vmatpush1.bf16.msra.mxu0 %v1892
        %2051 = vmatprep.subr.bf16.mxu0 %v1897
        %2052 = vmatpush1.bf16.msra.mxu0 %v1896
        %2053 = vmatprep.subr.bf16.mxu0 %v1901
        %2054 = vmatpush1.bf16.msra.mxu0 %v1900
        %2055 = vmatprep.subr.bf16.mxu0 %v1905
        %2056 = vmatpush1.bf16.msra.mxu0 %v1904
        %2057 = vmatprep.subr.bf16.mxu0 %v1909
        %2058 = vmatpush1.bf16.msra.mxu0 %v1908
        %2059 = vmatprep.subr.bf16.mxu0 %v1913
        %2060 = vmatpush1.bf16.msra.mxu0 %v1912
        %2061 = vmatprep.subr.bf16.mxu0 %v1917
        %2062 = vmatpush1.bf16.msra.mxu0 %v1916
        %2063 = vmatprep.subr.bf16.mxu0 %v1921
        %2064 = vmatpush1.bf16.msra.mxu0 %v1920
        %2065 = vmatprep.subr.bf16.mxu0 %v1925
        %2066 = vmatpush1.bf16.msra.mxu0 %v1924
        %2067 = vmatprep.subr.bf16.mxu0 %v1929
        %2068 = vmatpush1.bf16.msra.mxu0 %v1928
        %2069 = vmatprep.subr.bf16.mxu0 %v1933
        %2070 = vmatpush1.bf16.msra.mxu0 %v1932
        %2071 = vmatprep.mubr.bf16.mxu0 %v1675
        %2072 = vmatmul.mubr.bf16.gmra.mrb[0].mxu0 %v1674
        %v2073 = vpop.f32.mrb[0].mxu0
        %v2074 = vadd.f32 0.0, %v2073
        %v2075 = vpop.f32.mrb[0].mxu0
        %v2076 = vadd.f32 0.0, %v2075
        %v2077 = vpop.f32.mrb[0].mxu0
        %v2078 = vpop.f32.mrb[0].mxu0
        %2079 = vdwg.mxu0
        %v2080 = vadd.f32 %v1416, %v2033
        %v2081 = vadd.f32 %v1418, %v2035
        %v2082 = vadd.f32 %v1529, %v2074
        %v2083 = vadd.f32 %v1531, %v2076
        %v2084 = vadd.f32 %v1420, %v2033
        %v2085 = vadd.f32 %v1422, %v2035
        %v2086 = vadd.f32 %v1533, %v2074
        %v2087 = vadd.f32 %v1535, %v2076
        %v2088 = vadd.f32 %v1426, %v2033
        %v2089 = vadd.f32 %v1428, %v2035
        %v2090 = vadd.f32 %v1539, %v2074
        %v2091 = vadd.f32 %v1541, %v2076
        %v2092 = vadd.f32 %v1430, %v2033
        %v2093 = vadd.f32 %v1432, %v2035
        %v2094 = vadd.f32 %v1543, %v2074
        %v2095 = vadd.f32 %v1545, %v2076
        %v2096 = vadd.f32 %v1436, %v2033
        %v2097 = vadd.f32 %v1438, %v2035
        %v2098 = vadd.f32 %v1549, %v2074
        %v2099 = vadd.f32 %v1551, %v2076
        %v2100 = vadd.f32 %v1440, %v2033
        %v2101 = vadd.f32 %v1442, %v2035
        %v2102 = vadd.f32 %v1553, %v2074
        %v2103 = vadd.f32 %v1555, %v2076
        %v2104 = vadd.f32 %v1446, %v2033
        %v2105 = vadd.f32 %v1448, %v2035
        %v2106 = vadd.f32 %v1559, %v2074
        %v2107 = vadd.f32 %v1561, %v2076
        %v2108 = vadd.f32 %v1450, %v2033
        %v2109 = vadd.f32 %v1452, %v2035
        %v2110 = vadd.f32 %v1563, %v2074
        %v2111 = vadd.f32 %v1565, %v2076
        %v2112 = vadd.f32 %v1456, %v2033
        %v2113 = vadd.f32 %v1458, %v2035
        %v2114 = vadd.f32 %v1569, %v2074
        %v2115 = vadd.f32 %v1571, %v2076
        %v2116 = vadd.f32 %v1460, %v2033
        %v2117 = vadd.f32 %v1462, %v2035
        %v2118 = vadd.f32 %v1573, %v2074
        %v2119 = vadd.f32 %v1575, %v2076
        %v2120 = vadd.f32 %v1466, %v2033
        %v2121 = vadd.f32 %v1468, %v2035
        %v2122 = vadd.f32 %v1579, %v2074
        %v2123 = vadd.f32 %v1581, %v2076
        %v2124 = vadd.f32 %v1470, %v2033
        %v2125 = vadd.f32 %v1472, %v2035
        %v2126 = vadd.f32 %v1583, %v2074
        %v2127 = vadd.f32 %v1585, %v2076
        %v2128 = vadd.f32 %v1476, %v2033
        %v2129 = vadd.f32 %v1478, %v2035
        %v2130 = vadd.f32 %v1589, %v2074
        %v2131 = vadd.f32 %v1591, %v2076
        %v2132 = vadd.f32 %v1480, %v2033
        %v2133 = vadd.f32 %v1482, %v2035
        %v2134 = vadd.f32 %v1593, %v2074
        %v2135 = vadd.f32 %v1595, %v2076
        %v2136 = vadd.f32 %v1486, %v2033
        %v2137 = vadd.f32 %v1488, %v2035
        %v2138 = vadd.f32 %v1599, %v2074
        %v2139 = vadd.f32 %v1601, %v2076
        %v2140 = vadd.f32 %v1490, %v2033
        %v2141 = vadd.f32 %v1492, %v2035
        %v2142 = vadd.f32 %v1603, %v2074
        %v2143 = vadd.f32 %v1605, %v2076
        %v2144 = vld [vmem:[%s7] sm:$0xf]
        %v2146 = vlaneseq
        %v2147 = vshrl.u32 %v2146, 7
        %v2148 = vsub.s32 0, %v2147
        %v2149 = vrot.slane %v2144, %v2148
        %v2150 = vlaneseq
        %v2151 = vshrl.u32 %v2150, 7
        %v2152 = vsub.s32 1, %v2151
        %v2153 = vrot.slane %v2144, %v2152
        %v2154 = vlaneseq
        %v2155 = vshrl.u32 %v2154, 7
        %v2156 = vsub.s32 2, %v2155
        %v2157 = vrot.slane %v2144, %v2156
        %v2158 = vlaneseq
        %v2159 = vshrl.u32 %v2158, 7
        %v2160 = vsub.s32 3, %v2159
        %v2161 = vrot.slane %v2144, %v2160
        %v2166 = vadd.f32 %v2080, %v2149
        %v2167 = vadd.f32 %v2081, %v2153
        %v2168 = vadd.f32 %v2082, %v2157
        %v2169 = vadd.f32 %v2083, %v2161
        %v2170 = vadd.f32 %v2084, %v2149
        %v2171 = vadd.f32 %v2085, %v2153
        %v2172 = vadd.f32 %v2086, %v2157
        %v2173 = vadd.f32 %v2087, %v2161
        %v2174 = vadd.f32 %v2088, %v2149
        %v2175 = vadd.f32 %v2089, %v2153
        %v2176 = vadd.f32 %v2090, %v2157
        %v2177 = vadd.f32 %v2091, %v2161
        %v2178 = vadd.f32 %v2092, %v2149
        %v2179 = vadd.f32 %v2093, %v2153
        %v2180 = vadd.f32 %v2094, %v2157
        %v2181 = vadd.f32 %v2095, %v2161
        %v2182 = vadd.f32 %v2096, %v2149
        %v2183 = vadd.f32 %v2097, %v2153
        %v2184 = vadd.f32 %v2098, %v2157
        %v2185 = vadd.f32 %v2099, %v2161
        %v2186 = vadd.f32 %v2100, %v2149
        %v2187 = vadd.f32 %v2101, %v2153
        %v2188 = vadd.f32 %v2102, %v2157
        %v2189 = vadd.f32 %v2103, %v2161
        %v2190 = vadd.f32 %v2104, %v2149
        %v2191 = vadd.f32 %v2105, %v2153
        %v2192 = vadd.f32 %v2106, %v2157
        %v2193 = vadd.f32 %v2107, %v2161
        %v2194 = vadd.f32 %v2108, %v2149
        %v2195 = vadd.f32 %v2109, %v2153
        %v2196 = vadd.f32 %v2110, %v2157
        %v2197 = vadd.f32 %v2111, %v2161
        %v2198 = vadd.f32 %v2112, %v2149
        %v2199 = vadd.f32 %v2113, %v2153
        %v2200 = vadd.f32 %v2114, %v2157
        %v2201 = vadd.f32 %v2115, %v2161
        %v2202 = vadd.f32 %v2116, %v2149
        %v2203 = vadd.f32 %v2117, %v2153
        %v2204 = vadd.f32 %v2118, %v2157
        %v2205 = vadd.f32 %v2119, %v2161
        %v2206 = vadd.f32 %v2120, %v2149
        %v2207 = vadd.f32 %v2121, %v2153
        %v2208 = vadd.f32 %v2122, %v2157
        %v2209 = vadd.f32 %v2123, %v2161
        %v2210 = vadd.f32 %v2124, %v2149
        %v2211 = vadd.f32 %v2125, %v2153
        %v2212 = vadd.f32 %v2126, %v2157
        %v2213 = vadd.f32 %v2127, %v2161
        %v2214 = vadd.f32 %v2128, %v2149
        %v2215 = vadd.f32 %v2129, %v2153
        %v2216 = vadd.f32 %v2130, %v2157
        %v2217 = vadd.f32 %v2131, %v2161
        %v2218 = vadd.f32 %v2132, %v2149
        %v2219 = vadd.f32 %v2133, %v2153
        %v2220 = vadd.f32 %v2134, %v2157
        %v2221 = vadd.f32 %v2135, %v2161
        %v2222 = vadd.f32 %v2136, %v2149
        %v2223 = vadd.f32 %v2137, %v2153
        %v2224 = vadd.f32 %v2138, %v2157
        %v2225 = vadd.f32 %v2139, %v2161
        %v2226 = vadd.f32 %v2140, %v2149
        %v2227 = vadd.f32 %v2141, %v2153
        %v2228 = vadd.f32 %v2142, %v2157
        %v2229 = vadd.f32 %v2143, %v2161
        %v2230 = vmax.f32 %v2166, 0.0
        %v2231 = vmax.f32 %v2167, 0.0
        %v2232 = vmax.f32 %v2168, 0.0
        %v2233 = vmax.f32 %v2169, 0.0
        %v2234 = vmax.f32 %v2170, 0.0
        %v2235 = vmax.f32 %v2171, 0.0
        %v2236 = vmax.f32 %v2172, 0.0
        %v2237 = vmax.f32 %v2173, 0.0
        %v2238 = vmax.f32 %v2174, 0.0
        %v2239 = vmax.f32 %v2175, 0.0
        %v2240 = vmax.f32 %v2176, 0.0
        %v2241 = vmax.f32 %v2177, 0.0
        %v2242 = vmax.f32 %v2178, 0.0
        %v2243 = vmax.f32 %v2179, 0.0
        %v2244 = vmax.f32 %v2180, 0.0
        %v2245 = vmax.f32 %v2181, 0.0
        %v2246 = vmax.f32 %v2182, 0.0
        %v2247 = vmax.f32 %v2183, 0.0
        %v2248 = vmax.f32 %v2184, 0.0
        %v2249 = vmax.f32 %v2185, 0.0
        %v2250 = vmax.f32 %v2186, 0.0
        %v2251 = vmax.f32 %v2187, 0.0
        %v2252 = vmax.f32 %v2188, 0.0
        %v2253 = vmax.f32 %v2189, 0.0
        %v2254 = vmax.f32 %v2190, 0.0
        %v2255 = vmax.f32 %v2191, 0.0
        %v2256 = vmax.f32 %v2192, 0.0
        %v2257 = vmax.f32 %v2193, 0.0
        %v2258 = vmax.f32 %v2194, 0.0
        %v2259 = vmax.f32 %v2195, 0.0
        %v2260 = vmax.f32 %v2196, 0.0
        %v2261 = vmax.f32 %v2197, 0.0
        %v2262 = vmax.f32 %v2198, 0.0
        %v2263 = vmax.f32 %v2199, 0.0
        %v2264 = vmax.f32 %v2200, 0.0
        %v2265 = vmax.f32 %v2201, 0.0
        %v2266 = vmax.f32 %v2202, 0.0
        %v2267 = vmax.f32 %v2203, 0.0
        %v2268 = vmax.f32 %v2204, 0.0
        %v2269 = vmax.f32 %v2205, 0.0
        %v2270 = vmax.f32 %v2206, 0.0
        %v2271 = vmax.f32 %v2207, 0.0
        %v2272 = vmax.f32 %v2208, 0.0
        %v2273 = vmax.f32 %v2209, 0.0
        %v2274 = vmax.f32 %v2210, 0.0
        %v2275 = vmax.f32 %v2211, 0.0
        %v2276 = vmax.f32 %v2212, 0.0
        %v2277 = vmax.f32 %v2213, 0.0
        %v2278 = vmax.f32 %v2214, 0.0
        %v2279 = vmax.f32 %v2215, 0.0
        %v2280 = vmax.f32 %v2216, 0.0
        %v2281 = vmax.f32 %v2217, 0.0
        %v2282 = vmax.f32 %v2218, 0.0
        %v2283 = vmax.f32 %v2219, 0.0
        %v2284 = vmax.f32 %v2220, 0.0
        %v2285 = vmax.f32 %v2221, 0.0
        %v2286 = vmax.f32 %v2222, 0.0
        %v2287 = vmax.f32 %v2223, 0.0
        %v2288 = vmax.f32 %v2224, 0.0
        %v2289 = vmax.f32 %v2225, 0.0
        %v2290 = vmax.f32 %v2226, 0.0
        %v2291 = vmax.f32 %v2227, 0.0
        %v2292 = vmax.f32 %v2228, 0.0
        %v2293 = vmax.f32 %v2229, 0.0
        %v2294 = vpack.c.bf16 %v2230, %v2230
        %v2295 = vpack.c.bf16 %v2231, %v2231
        %v2296 = vpack.c.bf16 %v2232, %v2232
        %v2297 = vpack.c.bf16 %v2233, %v2233
        %v2298 = vpack.c.bf16 %v2234, %v2234
        %v2299 = vpack.c.bf16 %v2235, %v2235
        %v2300 = vpack.c.bf16 %v2236, %v2236
        %v2301 = vpack.c.bf16 %v2237, %v2237
        %v2302 = vpack.c.bf16 %v2238, %v2238
        %v2303 = vpack.c.bf16 %v2239, %v2239
        %v2304 = vpack.c.bf16 %v2240, %v2240
        %v2305 = vpack.c.bf16 %v2241, %v2241
        %v2306 = vpack.c.bf16 %v2242, %v2242
        %v2307 = vpack.c.bf16 %v2243, %v2243
        %v2308 = vpack.c.bf16 %v2244, %v2244
        %v2309 = vpack.c.bf16 %v2245, %v2245
        %v2310 = vpack.c.bf16 %v2246, %v2246
        %v2311 = vpack.c.bf16 %v2247, %v2247
        %v2312 = vpack.c.bf16 %v2248, %v2248
        %v2313 = vpack.c.bf16 %v2249, %v2249
        %v2314 = vpack.c.bf16 %v2250, %v2250
        %v2315 = vpack.c.bf16 %v2251, %v2251
        %v2316 = vpack.c.bf16 %v2252, %v2252
        %v2317 = vpack.c.bf16 %v2253, %v2253
        %v2318 = vpack.c.bf16 %v2254, %v2254
        %v2319 = vpack.c.bf16 %v2255, %v2255
        %v2320 = vpack.c.bf16 %v2256, %v2256
        %v2321 = vpack.c.bf16 %v2257, %v2257
        %v2322 = vpack.c.bf16 %v2258, %v2258
        %v2323 = vpack.c.bf16 %v2259, %v2259
        %v2324 = vpack.c.bf16 %v2260, %v2260
        %v2325 = vpack.c.bf16 %v2261, %v2261
        %v2326 = vpack.c.bf16 %v2262, %v2262
        %v2327 = vpack.c.bf16 %v2263, %v2263
        %v2328 = vpack.c.bf16 %v2264, %v2264
        %v2329 = vpack.c.bf16 %v2265, %v2265
        %v2330 = vpack.c.bf16 %v2266, %v2266
        %v2331 = vpack.c.bf16 %v2267, %v2267
        %v2332 = vpack.c.bf16 %v2268, %v2268
        %v2333 = vpack.c.bf16 %v2269, %v2269
        %v2334 = vpack.c.bf16 %v2270, %v2270
        %v2335 = vpack.c.bf16 %v2271, %v2271
        %v2336 = vpack.c.bf16 %v2272, %v2272
        %v2337 = vpack.c.bf16 %v2273, %v2273
        %v2338 = vpack.c.bf16 %v2274, %v2274
        %v2339 = vpack.c.bf16 %v2275, %v2275
        %v2340 = vpack.c.bf16 %v2276, %v2276
        %v2341 = vpack.c.bf16 %v2277, %v2277
        %v2342 = vpack.c.bf16 %v2278, %v2278
        %v2343 = vpack.c.bf16 %v2279, %v2279
        %v2344 = vpack.c.bf16 %v2280, %v2280
        %v2345 = vpack.c.bf16 %v2281, %v2281
        %v2346 = vpack.c.bf16 %v2282, %v2282
        %v2347 = vpack.c.bf16 %v2283, %v2283
        %v2348 = vpack.c.bf16 %v2284, %v2284
        %v2349 = vpack.c.bf16 %v2285, %v2285
        %v2350 = vpack.c.bf16 %v2286, %v2286
        %v2351 = vpack.c.bf16 %v2287, %v2287
        %v2352 = vpack.c.bf16 %v2288, %v2288
        %v2353 = vpack.c.bf16 %v2289, %v2289
        %v2354 = vpack.c.bf16 %v2290, %v2290
        %v2355 = vpack.c.bf16 %v2291, %v2291
        %v2356 = vpack.c.bf16 %v2292, %v2292
        %v2357 = vpack.c.bf16 %v2293, %v2293
        %v2422 = vunpack.c.l.b16 %v2294
        %v2423 = vunpack.c.l.b16 %v2295
        %v2424 = vunpack.c.l.b16 %v2296
        %v2425 = vunpack.c.l.b16 %v2297
        %v2426 = vunpack.c.l.b16 %v2298
        %v2427 = vunpack.c.l.b16 %v2299
        %v2428 = vunpack.c.l.b16 %v2300
        %v2429 = vunpack.c.l.b16 %v2301
        %v2430 = vunpack.c.l.b16 %v2302
        %v2431 = vunpack.c.l.b16 %v2303
        %v2432 = vunpack.c.l.b16 %v2304
        %v2433 = vunpack.c.l.b16 %v2305
        %v2434 = vunpack.c.l.b16 %v2306
        %v2435 = vunpack.c.l.b16 %v2307
        %v2436 = vunpack.c.l.b16 %v2308
        %v2437 = vunpack.c.l.b16 %v2309
        %v2438 = vunpack.c.l.b16 %v2310
        %v2439 = vunpack.c.l.b16 %v2311
        %v2440 = vunpack.c.l.b16 %v2312
        %v2441 = vunpack.c.l.b16 %v2313
        %v2442 = vunpack.c.l.b16 %v2314
        %v2443 = vunpack.c.l.b16 %v2315
        %v2444 = vunpack.c.l.b16 %v2316
        %v2445 = vunpack.c.l.b16 %v2317
        %v2446 = vunpack.c.l.b16 %v2318
        %v2447 = vunpack.c.l.b16 %v2319
        %v2448 = vunpack.c.l.b16 %v2320
        %v2449 = vunpack.c.l.b16 %v2321
        %v2450 = vunpack.c.l.b16 %v2322
        %v2451 = vunpack.c.l.b16 %v2323
        %v2452 = vunpack.c.l.b16 %v2324
        %v2453 = vunpack.c.l.b16 %v2325
        %v2454 = vunpack.c.l.b16 %v2326
        %v2455 = vunpack.c.l.b16 %v2327
        %v2456 = vunpack.c.l.b16 %v2328
        %v2457 = vunpack.c.l.b16 %v2329
        %v2458 = vunpack.c.l.b16 %v2330
        %v2459 = vunpack.c.l.b16 %v2331
        %v2460 = vunpack.c.l.b16 %v2332
        %v2461 = vunpack.c.l.b16 %v2333
        %v2462 = vunpack.c.l.b16 %v2334
        %v2463 = vunpack.c.l.b16 %v2335
        %v2464 = vunpack.c.l.b16 %v2336
        %v2465 = vunpack.c.l.b16 %v2337
        %v2466 = vunpack.c.l.b16 %v2338
        %v2467 = vunpack.c.l.b16 %v2339
        %v2468 = vunpack.c.l.b16 %v2340
        %v2469 = vunpack.c.l.b16 %v2341
        %v2470 = vunpack.c.l.b16 %v2342
        %v2471 = vunpack.c.l.b16 %v2343
        %v2472 = vunpack.c.l.b16 %v2344
        %v2473 = vunpack.c.l.b16 %v2345
        %v2474 = vunpack.c.l.b16 %v2346
        %v2475 = vunpack.c.l.b16 %v2347
        %v2476 = vunpack.c.l.b16 %v2348
        %v2477 = vunpack.c.l.b16 %v2349
        %v2478 = vunpack.c.l.b16 %v2350
        %v2479 = vunpack.c.l.b16 %v2351
        %v2480 = vunpack.c.l.b16 %v2352
        %v2481 = vunpack.c.l.b16 %v2353
        %v2482 = vunpack.c.l.b16 %v2354
        %v2483 = vunpack.c.l.b16 %v2355
        %v2484 = vunpack.c.l.b16 %v2356
        %v2485 = vunpack.c.l.b16 %v2357
        %v2486 = vld [vmem:[%s8] sm:$0xf]
        %v2487 = vld [vmem:[%s8 + $0x4] sm:$0xf]
        %v2488 = vld [vmem:[%s8 + $0x8] sm:$0xf]
        %v2489 = vld [vmem:[%s8 + $0xc] sm:$0xf]
        %v2490 = vld [vmem:[%s8 + $0x10] sm:$0xf]
        %v2491 = vld [vmem:[%s8 + $0x14] sm:$0xf]
        %v2492 = vld [vmem:[%s8 + $0x18] sm:$0xf]
        %v2493 = vld [vmem:[%s8 + $0x1c] sm:$0xf]
        %v2494 = vld [vmem:[%s8 + $0x20] sm:$0xf]
        %v2495 = vld [vmem:[%s8 + $0x24] sm:$0xf]
        %v2496 = vld [vmem:[%s8 + $0x28] sm:$0xf]
        %v2497 = vld [vmem:[%s8 + $0x2c] sm:$0xf]
        %v2498 = vld [vmem:[%s8 + $0x30] sm:$0xf]
        %v2499 = vld [vmem:[%s8 + $0x34] sm:$0xf]
        %v2500 = vld [vmem:[%s8 + $0x38] sm:$0xf]
        %v2501 = vld [vmem:[%s8 + $0x3c] sm:$0xf]
        %v2502 = vld [vmem:[%s8 + $0x40] sm:$0xf]
        %v2503 = vld [vmem:[%s8 + $0x44] sm:$0xf]
        %v2504 = vld [vmem:[%s8 + $0x48] sm:$0xf]
        %v2505 = vld [vmem:[%s8 + $0x4c] sm:$0xf]
        %v2506 = vld [vmem:[%s8 + $0x50] sm:$0xf]
        %v2507 = vld [vmem:[%s8 + $0x54] sm:$0xf]
        %v2508 = vld [vmem:[%s8 + $0x58] sm:$0xf]
        %v2509 = vld [vmem:[%s8 + $0x5c] sm:$0xf]
        %v2510 = vld [vmem:[%s8 + $0x60] sm:$0xf]
        %v2511 = vld [vmem:[%s8 + $0x64] sm:$0xf]
        %v2512 = vld [vmem:[%s8 + $0x68] sm:$0xf]
        %v2513 = vld [vmem:[%s8 + $0x6c] sm:$0xf]
        %v2514 = vld [vmem:[%s8 + $0x70] sm:$0xf]
        %v2515 = vld [vmem:[%s8 + $0x74] sm:$0xf]
        %v2516 = vld [vmem:[%s8 + $0x78] sm:$0xf]
        %v2517 = vld [vmem:[%s8 + $0x7c] sm:$0xf]
        %v2518 = vld [vmem:[%s8 + $0x80] sm:$0xf]
        %v2519 = vld [vmem:[%s8 + $0x84] sm:$0xf]
        %v2520 = vld [vmem:[%s8 + $0x88] sm:$0xf]
        %v2521 = vld [vmem:[%s8 + $0x8c] sm:$0xf]
        %v2522 = vld [vmem:[%s8 + $0x90] sm:$0xf]
        %v2523 = vld [vmem:[%s8 + $0x94] sm:$0xf]
        %v2524 = vld [vmem:[%s8 + $0x98] sm:$0xf]
        %v2525 = vld [vmem:[%s8 + $0x9c] sm:$0xf]
        %v2526 = vld [vmem:[%s8 + $0xa0] sm:$0xf]
        %v2527 = vld [vmem:[%s8 + $0xa4] sm:$0xf]
        %v2528 = vld [vmem:[%s8 + $0xa8] sm:$0xf]
        %v2529 = vld [vmem:[%s8 + $0xac] sm:$0xf]
        %v2530 = vld [vmem:[%s8 + $0xb0] sm:$0xf]
        %v2531 = vld [vmem:[%s8 + $0xb4] sm:$0xf]
        %v2532 = vld [vmem:[%s8 + $0xb8] sm:$0xf]
        %v2533 = vld [vmem:[%s8 + $0xbc] sm:$0xf]
        %v2534 = vld [vmem:[%s8 + $0xc0] sm:$0xf]
        %v2535 = vld [vmem:[%s8 + $0xc4] sm:$0xf]
        %v2536 = vld [vmem:[%s8 + $0xc8] sm:$0xf]
        %v2537 = vld [vmem:[%s8 + $0xcc] sm:$0xf]
        %v2538 = vld [vmem:[%s8 + $0xd0] sm:$0xf]
        %v2539 = vld [vmem:[%s8 + $0xd4] sm:$0xf]
        %v2540 = vld [vmem:[%s8 + $0xd8] sm:$0xf]
        %v2541 = vld [vmem:[%s8 + $0xdc] sm:$0xf]
        %v2542 = vld [vmem:[%s8 + $0xe0] sm:$0xf]
        %v2543 = vld [vmem:[%s8 + $0xe4] sm:$0xf]
        %v2544 = vld [vmem:[%s8 + $0xe8] sm:$0xf]
        %v2545 = vld [vmem:[%s8 + $0xec] sm:$0xf]
        %v2546 = vld [vmem:[%s8 + $0xf0] sm:$0xf]
        %v2547 = vld [vmem:[%s8 + $0xf4] sm:$0xf]
        %v2548 = vld [vmem:[%s8 + $0xf8] sm:$0xf]
        %v2549 = vld [vmem:[%s8 + $0xfc] sm:$0xf]
        %v2550 = vld [vmem:[%s9] sm:$0x1]
        %v2552 = vlaneseq
        %v2553 = vshrl.u32 %v2552, 7
        %v2554 = vsub.s32 0, %v2553
        %v2555 = vrot.slane %v2550, %v2554
        %v2557 = vpack.c.b16 %v2426, %v2422
        %v2558 = vpack.c.b16 %v2427, %v2423
        %v2559 = vpack.c.b16 %v2428, %v2424
        %v2560 = vpack.c.b16 %v2429, %v2425
        %v2561 = vpack.c.b16 %v2434, %v2430
        %v2562 = vpack.c.b16 %v2435, %v2431
        %v2563 = vpack.c.b16 %v2436, %v2432
        %v2564 = vpack.c.b16 %v2437, %v2433
        %v2565 = vpack.c.b16 %v2442, %v2438
        %v2566 = vpack.c.b16 %v2443, %v2439
        %v2567 = vpack.c.b16 %v2444, %v2440
        %v2568 = vpack.c.b16 %v2445, %v2441
        %v2569 = vpack.c.b16 %v2450, %v2446
        %v2570 = vpack.c.b16 %v2451, %v2447
        %v2571 = vpack.c.b16 %v2452, %v2448
        %v2572 = vpack.c.b16 %v2453, %v2449
        %v2573 = vpack.c.b16 %v2458, %v2454
        %v2574 = vpack.c.b16 %v2459, %v2455
        %v2575 = vpack.c.b16 %v2460, %v2456
        %v2576 = vpack.c.b16 %v2461, %v2457
        %v2577 = vpack.c.b16 %v2466, %v2462
        %v2578 = vpack.c.b16 %v2467, %v2463
        %v2579 = vpack.c.b16 %v2468, %v2464
        %v2580 = vpack.c.b16 %v2469, %v2465
        %v2581 = vpack.c.b16 %v2474, %v2470
        %v2582 = vpack.c.b16 %v2475, %v2471
        %v2583 = vpack.c.b16 %v2476, %v2472
        %v2584 = vpack.c.b16 %v2477, %v2473
        %v2585 = vpack.c.b16 %v2482, %v2478
        %v2586 = vpack.c.b16 %v2483, %v2479
        %v2587 = vpack.c.b16 %v2484, %v2480
        %v2588 = vpack.c.b16 %v2485, %v2481
        %v2685 = vunpack.c.l.b16 %v2486
        %v2686 = vunpack.c.l.b16 %v2487
        %v2687 = vunpack.c.l.b16 %v2488
        %v2688 = vunpack.c.l.b16 %v2489
        %v2689 = vunpack.c.l.b16 %v2490
        %v2690 = vunpack.c.l.b16 %v2491
        %v2691 = vunpack.c.l.b16 %v2492
        %v2692 = vunpack.c.l.b16 %v2493
        %v2693 = vunpack.c.l.b16 %v2494
        %v2694 = vunpack.c.l.b16 %v2495
        %v2695 = vunpack.c.l.b16 %v2496
        %v2696 = vunpack.c.l.b16 %v2497
        %v2697 = vunpack.c.l.b16 %v2498
        %v2698 = vunpack.c.l.b16 %v2499
        %v2699 = vunpack.c.l.b16 %v2500
        %v2700 = vunpack.c.l.b16 %v2501
        %v2701 = vunpack.c.l.b16 %v2502
        %v2702 = vunpack.c.l.b16 %v2503
        %v2703 = vunpack.c.l.b16 %v2504
        %v2704 = vunpack.c.l.b16 %v2505
        %v2705 = vunpack.c.l.b16 %v2506
        %v2706 = vunpack.c.l.b16 %v2507
        %v2707 = vunpack.c.l.b16 %v2508
        %v2708 = vunpack.c.l.b16 %v2509
        %v2709 = vunpack.c.l.b16 %v2510
        %v2710 = vunpack.c.l.b16 %v2511
        %v2711 = vunpack.c.l.b16 %v2512
        %v2712 = vunpack.c.l.b16 %v2513
        %v2713 = vunpack.c.l.b16 %v2514
        %v2714 = vunpack.c.l.b16 %v2515
        %v2715 = vunpack.c.l.b16 %v2516
        %v2716 = vunpack.c.l.b16 %v2517
        %v2717 = vunpack.c.l.b16 %v2518
        %v2718 = vunpack.c.l.b16 %v2519
        %v2719 = vunpack.c.l.b16 %v2520
        %v2720 = vunpack.c.l.b16 %v2521
        %v2721 = vunpack.c.l.b16 %v2522
        %v2722 = vunpack.c.l.b16 %v2523
        %v2723 = vunpack.c.l.b16 %v2524
        %v2724 = vunpack.c.l.b16 %v2525
        %v2725 = vunpack.c.l.b16 %v2526
        %v2726 = vunpack.c.l.b16 %v2527
        %v2727 = vunpack.c.l.b16 %v2528
        %v2728 = vunpack.c.l.b16 %v2529
        %v2729 = vunpack.c.l.b16 %v2530
        %v2730 = vunpack.c.l.b16 %v2531
        %v2731 = vunpack.c.l.b16 %v2532
        %v2732 = vunpack.c.l.b16 %v2533
        %v2733 = vunpack.c.l.b16 %v2534
        %v2734 = vunpack.c.l.b16 %v2535
        %v2735 = vunpack.c.l.b16 %v2536
        %v2736 = vunpack.c.l.b16 %v2537
        %v2737 = vunpack.c.l.b16 %v2538
        %v2738 = vunpack.c.l.b16 %v2539
        %v2739 = vunpack.c.l.b16 %v2540
        %v2740 = vunpack.c.l.b16 %v2541
        %v2741 = vunpack.c.l.b16 %v2542
        %v2742 = vunpack.c.l.b16 %v2543
        %v2743 = vunpack.c.l.b16 %v2544
        %v2744 = vunpack.c.l.b16 %v2545
        %v2745 = vunpack.c.l.b16 %v2546
        %v2746 = vunpack.c.l.b16 %v2547
        %v2747 = vunpack.c.l.b16 %v2548
        %v2748 = vunpack.c.l.b16 %v2549
        %v2749 = vpack.c.b16 %v2686, %v2685
        %v2750 = vpack.c.b16 %v2688, %v2687
        %v2751 = vpack.c.b16 %v2690, %v2689
        %v2752 = vpack.c.b16 %v2692, %v2691
        %v2753 = vpack.c.b16 %v2694, %v2693
        %v2754 = vpack.c.b16 %v2696, %v2695
        %v2755 = vpack.c.b16 %v2698, %v2697
        %v2756 = vpack.c.b16 %v2700, %v2699
        %v2757 = vpack.c.b16 %v2702, %v2701
        %v2758 = vpack.c.b16 %v2704, %v2703
        %v2759 = vpack.c.b16 %v2706, %v2705
        %v2760 = vpack.c.b16 %v2708, %v2707
        %v2761 = vpack.c.b16 %v2710, %v2709
        %v2762 = vpack.c.b16 %v2712, %v2711
        %v2763 = vpack.c.b16 %v2714, %v2713
        %v2764 = vpack.c.b16 %v2716, %v2715
        %v2765 = vpack.c.b16 %v2718, %v2717
        %v2766 = vpack.c.b16 %v2720, %v2719
        %v2767 = vpack.c.b16 %v2722, %v2721
        %v2768 = vpack.c.b16 %v2724, %v2723
        %v2769 = vpack.c.b16 %v2726, %v2725
        %v2770 = vpack.c.b16 %v2728, %v2727
        %v2771 = vpack.c.b16 %v2730, %v2729
        %v2772 = vpack.c.b16 %v2732, %v2731
        %v2773 = vpack.c.b16 %v2734, %v2733
        %v2774 = vpack.c.b16 %v2736, %v2735
        %v2775 = vpack.c.b16 %v2738, %v2737
        %v2776 = vpack.c.b16 %v2740, %v2739
        %v2777 = vpack.c.b16 %v2742, %v2741
        %v2778 = vpack.c.b16 %v2744, %v2743
        %v2779 = vpack.c.b16 %v2746, %v2745
        %v2780 = vpack.c.b16 %v2748, %v2747
        %2813 = vmatprep.subr.bf16.mxu0 0
        %2814 = vmatpush1.bf16.msra.mxu0 %v2749
        %2815 = vmatprep.subr.bf16.mxu0 0
        %2816 = vmatpush1.bf16.msra.mxu0 %v2750
        %2817 = vmatprep.subr.bf16.mxu0 0
        %2818 = vmatpush1.bf16.msra.mxu0 %v2751
        %2819 = vmatprep.subr.bf16.mxu0 0
        %2820 = vmatpush1.bf16.msra.mxu0 %v2752
        %2821 = vmatprep.subr.bf16.mxu0 0
        %2822 = vmatpush1.bf16.msra.mxu0 %v2753
        %2823 = vmatprep.subr.bf16.mxu0 0
        %2824 = vmatpush1.bf16.msra.mxu0 %v2754
        %2825 = vmatprep.subr.bf16.mxu0 0
        %2826 = vmatpush1.bf16.msra.mxu0 %v2755
        %2827 = vmatprep.subr.bf16.mxu0 0
        %2828 = vmatpush1.bf16.msra.mxu0 %v2756
        %2829 = vmatprep.subr.bf16.mxu0 0
        %2830 = vmatpush1.bf16.msra.mxu0 %v2757
        %2831 = vmatprep.subr.bf16.mxu0 0
        %2832 = vmatpush1.bf16.msra.mxu0 %v2758
        %2833 = vmatprep.subr.bf16.mxu0 0
        %2834 = vmatpush1.bf16.msra.mxu0 %v2759
        %2835 = vmatprep.subr.bf16.mxu0 0
        %2836 = vmatpush1.bf16.msra.mxu0 %v2760
        %2837 = vmatprep.subr.bf16.mxu0 0
        %2838 = vmatpush1.bf16.msra.mxu0 %v2761
        %2839 = vmatprep.subr.bf16.mxu0 0
        %2840 = vmatpush1.bf16.msra.mxu0 %v2762
        %2841 = vmatprep.subr.bf16.mxu0 0
        %2842 = vmatpush1.bf16.msra.mxu0 %v2763
        %2843 = vmatprep.subr.bf16.mxu0 0
        %2844 = vmatpush1.bf16.msra.mxu0 %v2764
        %2845 = vmatprep.mubr.bf16.mxu0 %v2558
        %2846 = vmatmul.mubr.bf16.gmra.mrb[0].mxu0 %v2557
        %v2847 = vpop.f32.mrb[0].mxu0
        %v2848 = vadd.f32 %v2555, %v2847
        %v2849 = vpop.f32.mrb[0].mxu0
        %v2850 = vpop.f32.mrb[0].mxu0
        %v2851 = vadd.f32 %v2555, %v2850
        %v2852 = vpop.f32.mrb[0].mxu0
        %2853 = vmatprep.mubr.bf16.mxu0 %v2562
        %2854 = vmatmul.mubr.bf16.gmra.mrb[0].mxu0 %v2561
        %v2855 = vpop.f32.mrb[0].mxu0
        %v2856 = vadd.f32 %v2555, %v2855
        %v2857 = vpop.f32.mrb[0].mxu0
        %v2858 = vpop.f32.mrb[0].mxu0
        %v2859 = vadd.f32 %v2555, %v2858
        %v2860 = vpop.f32.mrb[0].mxu0
        %2861 = vmatprep.mubr.bf16.mxu0 %v2566
        %2862 = vmatmul.mubr.bf16.gmra.mrb[0].mxu0 %v2565
        %v2863 = vpop.f32.mrb[0].mxu0
        %v2864 = vadd.f32 %v2555, %v2863
        %v2865 = vpop.f32.mrb[0].mxu0
        %v2866 = vpop.f32.mrb[0].mxu0
        %v2867 = vadd.f32 %v2555, %v2866
        %v2868 = vpop.f32.mrb[0].mxu0
        %2869 = vmatprep.mubr.bf16.mxu0 %v2570
        %2870 = vmatmul.mubr.bf16.gmra.mrb[0].mxu0 %v2569
        %v2871 = vpop.f32.mrb[0].mxu0
        %v2872 = vadd.f32 %v2555, %v2871
        %v2873 = vpop.f32.mrb[0].mxu0
        %v2874 = vpop.f32.mrb[0].mxu0
        %v2875 = vadd.f32 %v2555, %v2874
        %v2876 = vpop.f32.mrb[0].mxu0
        %2877 = vmatprep.mubr.bf16.mxu0 %v2574
        %2878 = vmatmul.mubr.bf16.gmra.mrb[0].mxu0 %v2573
        %v2879 = vpop.f32.mrb[0].mxu0
        %v2880 = vadd.f32 %v2555, %v2879
        %v2881 = vpop.f32.mrb[0].mxu0
        %v2882 = vpop.f32.mrb[0].mxu0
        %v2883 = vadd.f32 %v2555, %v2882
        %v2884 = vpop.f32.mrb[0].mxu0
        %2885 = vmatprep.mubr.bf16.mxu0 %v2578
        %2886 = vmatmul.mubr.bf16.gmra.mrb[0].mxu0 %v2577
        %v2887 = vpop.f32.mrb[0].mxu0
        %v2888 = vadd.f32 %v2555, %v2887
        %v2889 = vpop.f32.mrb[0].mxu0
        %v2890 = vpop.f32.mrb[0].mxu0
        %v2891 = vadd.f32 %v2555, %v2890
        %v2892 = vpop.f32.mrb[0].mxu0
        %2893 = vmatprep.mubr.bf16.mxu0 %v2582
        %2894 = vmatmul.mubr.bf16.gmra.mrb[0].mxu0 %v2581
        %v2895 = vpop.f32.mrb[0].mxu0
        %v2896 = vadd.f32 %v2555, %v2895
        %v2897 = vpop.f32.mrb[0].mxu0
        %v2898 = vpop.f32.mrb[0].mxu0
        %v2899 = vadd.f32 %v2555, %v2898
        %v2900 = vpop.f32.mrb[0].mxu0
        %2901 = vmatprep.mubr.bf16.mxu0 %v2586
        %2902 = vmatmul.mubr.bf16.gmra.mrb[0].mxu0 %v2585
        %v2903 = vpop.f32.mrb[0].mxu0
        %v2904 = vadd.f32 %v2555, %v2903
        %v2905 = vpop.f32.mrb[0].mxu0
        %v2906 = vpop.f32.mrb[0].mxu0
        %v2907 = vadd.f32 %v2555, %v2906
        %v2908 = vpop.f32.mrb[0].mxu0
        %2909 = vdwg.mxu0
        %2910 = vmatprep.subr.bf16.mxu0 0
        %2911 = vmatpush1.bf16.msra.mxu0 %v2765
        %2912 = vmatprep.subr.bf16.mxu0 0
        %2913 = vmatpush1.bf16.msra.mxu0 %v2766
        %2914 = vmatprep.subr.bf16.mxu0 0
        %2915 = vmatpush1.bf16.msra.mxu0 %v2767
        %2916 = vmatprep.subr.bf16.mxu0 0
        %2917 = vmatpush1.bf16.msra.mxu0 %v2768
        %2918 = vmatprep.subr.bf16.mxu0 0
        %2919 = vmatpush1.bf16.msra.mxu0 %v2769
        %2920 = vmatprep.subr.bf16.mxu0 0
        %2921 = vmatpush1.bf16.msra.mxu0 %v2770
        %2922 = vmatprep.subr.bf16.mxu0 0
        %2923 = vmatpush1.bf16.msra.mxu0 %v2771
        %2924 = vmatprep.subr.bf16.mxu0 0
        %2925 = vmatpush1.bf16.msra.mxu0 %v2772
        %2926 = vmatprep.subr.bf16.mxu0 0
        %2927 = vmatpush1.bf16.msra.mxu0 %v2773
        %2928 = vmatprep.subr.bf16.mxu0 0
        %2929 = vmatpush1.bf16.msra.mxu0 %v2774
        %2930 = vmatprep.subr.bf16.mxu0 0
        %2931 = vmatpush1.bf16.msra.mxu0 %v2775
        %2932 = vmatprep.subr.bf16.mxu0 0
        %2933 = vmatpush1.bf16.msra.mxu0 %v2776
        %2934 = vmatprep.subr.bf16.mxu0 0
        %2935 = vmatpush1.bf16.msra.mxu0 %v2777
        %2936 = vmatprep.subr.bf16.mxu0 0
        %2937 = vmatpush1.bf16.msra.mxu0 %v2778
        %2938 = vmatprep.subr.bf16.mxu0 0
        %2939 = vmatpush1.bf16.msra.mxu0 %v2779
        %2940 = vmatprep.subr.bf16.mxu0 0
        %2941 = vmatpush1.bf16.msra.mxu0 %v2780
        %2942 = vmatprep.mubr.bf16.mxu0 %v2560
        %2943 = vmatmul.mubr.bf16.gmra.mrb[0].mxu0 %v2559
        %v2944 = vpop.f32.mrb[0].mxu0
        %v2945 = vadd.f32 %v2848, %v2944
        %v2946 = vpop.f32.mrb[0].mxu0
        %v2947 = vpop.f32.mrb[0].mxu0
        %v2948 = vadd.f32 %v2851, %v2947
        %v2949 = vpop.f32.mrb[0].mxu0
        %2950 = vmatprep.mubr.bf16.mxu0 %v2564
        %2951 = vmatmul.mubr.bf16.gmra.mrb[0].mxu0 %v2563
        %v2952 = vpop.f32.mrb[0].mxu0
        %v2953 = vadd.f32 %v2856, %v2952
        %v2954 = vpop.f32.mrb[0].mxu0
        %v2955 = vpop.f32.mrb[0].mxu0
        %v2956 = vadd.f32 %v2859, %v2955
        %v2957 = vpop.f32.mrb[0].mxu0
        %2958 = vmatprep.mubr.bf16.mxu0 %v2568
        %2959 = vmatmul.mubr.bf16.gmra.mrb[0].mxu0 %v2567
        %v2960 = vpop.f32.mrb[0].mxu0
        %v2961 = vadd.f32 %v2864, %v2960
        %v2962 = vpop.f32.mrb[0].mxu0
        %v2963 = vpop.f32.mrb[0].mxu0
        %v2964 = vadd.f32 %v2867, %v2963
        %v2965 = vpop.f32.mrb[0].mxu0
        %2966 = vmatprep.mubr.bf16.mxu0 %v2572
        %2967 = vmatmul.mubr.bf16.gmra.mrb[0].mxu0 %v2571
        %v2968 = vpop.f32.mrb[0].mxu0
        %v2969 = vadd.f32 %v2872, %v2968
        %v2970 = vpop.f32.mrb[0].mxu0
        %v2971 = vpop.f32.mrb[0].mxu0
        %v2972 = vadd.f32 %v2875, %v2971
        %v2973 = vpop.f32.mrb[0].mxu0
        %2974 = vmatprep.mubr.bf16.mxu0 %v2576
        %2975 = vmatmul.mubr.bf16.gmra.mrb[0].mxu0 %v2575
        %v2976 = vpop.f32.mrb[0].mxu0
        %v2977 = vadd.f32 %v2880, %v2976
        %v2978 = vpop.f32.mrb[0].mxu0
        %v2979 = vpop.f32.mrb[0].mxu0
        %v2980 = vadd.f32 %v2883, %v2979
        %v2981 = vpop.f32.mrb[0].mxu0
        %2982 = vmatprep.mubr.bf16.mxu0 %v2580
        %2983 = vmatmul.mubr.bf16.gmra.mrb[0].mxu0 %v2579
        %v2984 = vpop.f32.mrb[0].mxu0
        %v2985 = vadd.f32 %v2888, %v2984
        %v2986 = vpop.f32.mrb[0].mxu0
        %v2987 = vpop.f32.mrb[0].mxu0
        %v2988 = vadd.f32 %v2891, %v2987
        %v2989 = vpop.f32.mrb[0].mxu0
        %2990 = vmatprep.mubr.bf16.mxu0 %v2584
        %2991 = vmatmul.mubr.bf16.gmra.mrb[0].mxu0 %v2583
        %v2992 = vpop.f32.mrb[0].mxu0
        %v2993 = vadd.f32 %v2896, %v2992
        %v2994 = vpop.f32.mrb[0].mxu0
        %v2995 = vpop.f32.mrb[0].mxu0
        %v2996 = vadd.f32 %v2899, %v2995
        %v2997 = vpop.f32.mrb[0].mxu0
        %2998 = vmatprep.mubr.bf16.mxu0 %v2588
        %2999 = vmatmul.mubr.bf16.gmra.mrb[0].mxu0 %v2587
        %v3000 = vpop.f32.mrb[0].mxu0
        %v3001 = vadd.f32 %v2904, %v3000
        %v3002 = vpop.f32.mrb[0].mxu0
        %v3003 = vpop.f32.mrb[0].mxu0
        %v3004 = vadd.f32 %v2907, %v3003
        %v3005 = vpop.f32.mrb[0].mxu0
        %3006 = vdwg.mxu0
        %v3007 = vmax.f32 %v2945, %v2961
        %v3008 = vmax.f32 %v2948, %v2964
        %v3009 = vmax.f32 %v2953, %v2969
        %v3010 = vmax.f32 %v2956, %v2972
        %v3011 = vmax.f32 %v3007, %v2977
        %v3012 = vmax.f32 %v3008, %v2980
        %v3013 = vmax.f32 %v3009, %v2985
        %v3014 = vmax.f32 %v3010, %v2988
        %v3015 = vmax.f32 %v3011, %v2993
        %v3016 = vmax.f32 %v3012, %v2996
        %v3017 = vmax.f32 %v3013, %v3001
        %v3018 = vmax.f32 %v3014, %v3004
        %v3019 = vmax.f32 %v3015, %v3016
        %v3020 = vmax.f32 %v3017, %v3018
        %v3021 = vmax.f32 %v3019, %v3020
        %3022 = vst [vmem:[%s481] sm:$0xff] %v3021
        %s3023 = sand.u32 %s249, 1
        %s3024 = scalar_lea.sflag [#allocation5], %s3023
        %s3025 = sand.u32 %s249, 1
        %s3026 = smul.addr %s3025, 8
        %s3027 = scalar_lea.vmem [#allocation8], %s3026
        // Predicated region
        $region107: #{tpu_custom_call.1} parent=93 // pred_check
          %p3028 = pneg %p259
        $region108: #{tpu_custom_call.1} parent=93 // pred_check_branch
          %3030 = sbr.rel (%p3028) target = $region110
        $region109: #{tpu_custom_call.1} parent=93 // pred_region
          %s3032 = ssub.s32 128, 128
          %3033 = vsyncadd %s3024, %s3032
          %s3034 = smul.addr %s26, 128
          %s3035 = scalar_lea.hbm %s10, %s3034
          %s3037 = sshll.u32 %s3027, 4
          %s3038 = int_to_ptr.vmem [resolvable:$true] %s3037
          %3040 = dma.vmem_to_hbm [thread:$0]  %s3038, 128, %s3035, %s3024
        $region110: #{tpu_custom_call.1} parent=93 // pred_fallthru
          _
      $region94: #{tpu_custom_call.1} parent=5 // pred_fallthru
        _
      %p3041 = scmp.le.s32.totalorder 2, %s21
      // Predicated region
      $region111: #{tpu_custom_call.1} parent=5 // pred_check
        %p3042 = pneg %p3041
      $region112: #{tpu_custom_call.1} parent=5 // pred_check_branch
        %3044 = sbr.rel (%p3042) target = $region114
      $region113: #{tpu_custom_call.1} parent=5 // pred_region
        %s3045 = ssub.s32 %s21, 2
        // Predicated region
        $region115: #{tpu_custom_call.1} parent=113 // pred_check
          %p3046 = pneg %p265
        $region116: #{tpu_custom_call.1} parent=113 // pred_check_branch
          %3048 = sbr.rel (%p3046) target = $region118
        $region117: #{tpu_custom_call.1} parent=113 // pred_region
          %s3049 = sand.u32 %s250, 1
          %s3050 = scalar_lea.sflag [#allocation5], %s3049
          %s3051 = sand.u32 %s250, 1
          %s3052 = smul.addr %s3051, 8
          %s3053 = scalar_lea.vmem [#allocation8], %s3052
          %3054 = dma.done %s3050, 128
        $region118: #{tpu_custom_call.1} parent=113 // pred_fallthru
          _
      $region114: #{tpu_custom_call.1} parent=5 // pred_fallthru
        _
    $region6: #{tpu_custom_call.1} parent=1 // loop_footer
      %s25 = sadd.s32 1, %s21
    $region7: #{tpu_custom_call.1} parent=1 // loop_footer_branch
      %20 = sbr.rel target = $region3
    $region8: #{tpu_custom_call.1} parent=1 // loop_exit
      _
    %3055 = vsyncpa [#allocation4], 1
    %s3056 = scalar_lea.sflag [#allocation4], 1
    %3057 = vsyncpa %s3056, 1
    %3058 = vsyncpa [#allocation7], 1
    %3059 = vsyncpa [#allocation5], 1
    %s3060 = scalar_lea.sflag [#allocation5], 1
    %3061 = vsyncpa %s3060, 1

</llo_original>
